<compile_context>
chip_gen: v7x
topology: tpu7x:2x2x1
jax: 0.10.0
libtpu: 0.0.40
codegen_flags: <defaults>
</compile_context>

<pallas_src>
import functools

import jax
import jax.numpy as jnp
import numpy as np
from jax import lax
from jax.experimental import pallas as pl
from jax.experimental.pallas import tpu as pltpu


# ----------------------------- Pallas kernel ------------------------------- #
def _fuse_kernel(xf_ref, w_ref, shift_ref, xs_hbm, out_ref, copy_sem, *,
                 alpha, kt, pad, t_in, t_out, c_slow, c_out, hw_tile):
    # xf_ref:    (C_in, T, hw_tile)        fast pathway block (bf16/f32)
    # w_ref:     (KT, C_out, C_in)         BN-scale-folded conv weight
    # shift_ref: (C_out, 1)  f32           folded BN shift + conv bias
    # xs_hbm:    (N, C_slow, T_out, HW)    slow pathway, raw HBM ref (pl.ANY)
    # out_ref:   (C_slow+C_out, T_out, hw_tile)  concatenated output block
    n = pl.program_id(0)
    j = pl.program_id(1)

    # (1) Stream the slow-pathway pass-through straight from HBM into the
    #     leading channel slab of the output block.  No vreg traffic, no
    #     double-buffered VMEM input for x_slow; overlaps with the matmuls.
    col0 = j * hw_tile
    if hw_tile % 128 == 0:
        col0 = pl.multiple_of(col0, 128)
    slow_cp = pltpu.make_async_copy(
        xs_hbm.at[n, :, :, pl.ds(col0, hw_tile)],
        out_ref.at[:c_slow],
        copy_sem)
    slow_cp.start()

    # (2) Fused conv(KT x 1 x 1, stride=alpha) + folded BN + ReLU.
    #     Per output frame: accumulate one 2-D MXU matmul per *valid* tap.
    #     Tap range is clamped statically -> exact zero-padding semantics.
    shift = shift_ref[...]                                   # (C_out, 1) f32
    for to in range(t_out):                                  # static loop
        t0 = to * alpha - pad
        k_lo = max(0, -t0)
        k_hi = min(kt, t_in - t0)
        acc = jnp.zeros((c_out, hw_tile), jnp.float32)
        for k in range(k_lo, k_hi):                          # static, <= KT
            acc += jnp.dot(w_ref[k], xf_ref[:, t0 + k, :],
                           preferred_element_type=jnp.float32)
        y = jnp.maximum(acc + shift, 0.0)                    # BN shift + ReLU
        out_ref[c_slow:, to, :] = y.astype(out_ref.dtype)    # lane-dense row

    # (3) Slow slab must have landed before the block is written back to HBM.
    slow_cp.wait()


# ------------------------------- Wrapper ------------------------------------ #
def _pick_hw_tile(hw, max_tile=512):
    """Largest multiple-of-128 divisor of hw, capped at max_tile (else hw)."""
    if hw % 128 != 0:
        return hw          # fall back to a whole spatial row (still correct)
    t = min(max_tile, hw)
    t -= t % 128
    while t >= 128 and hw % t != 0:
        t -= 128
    return t if t >= 128 else hw


def fuse_fast_to_slow(x_slow, x_fast, weight, bias,
                      bn_gamma, bn_beta, bn_mean, bn_var,
                      *, alpha, eps, hw_tile=None, compute_dtype=jnp.bfloat16):
    """x_slow: (N, C_slow, T_slow, H, W); x_fast: (N, C_in, T_fast, H, W)."""
    N, C_in, T, H, W = x_fast.shape
    Ns, C_slow, T_slow, Hs, Ws = x_slow.shape
    C_out, C_in_w, KT, kh, kw = weight.shape
    assert Ns == N and C_in_w == C_in and kh == 1 and kw == 1
    pad = KT // 2
    T_out = (T + 2 * pad - KT) // alpha + 1
    HW = H * W
    assert (T_slow, Hs, Ws) == (T_out, H, W)
    # Keep the channel-concat boundary sublane aligned (avoids RMW stores).
    assert C_slow % 8 == 0, "C_slow must be a multiple of 8"
    # TODO(synk): pad the channel dim in the wrapper for configs that violate
    # the alignment above instead of asserting.

    if hw_tile is None:
        hw_tile = _pick_hw_tile(HW)
    assert HW % hw_tile == 0
    n_hw = HW // hw_tile

    # Metadata-only reshapes: NCTHW -> (N, C, T, HW).
    xf = x_fast.reshape(N, C_in, T, HW).astype(compute_dtype)
    xs = x_slow.reshape(N, C_slow, T_out, HW)

    # Fold eval-mode BN in f32, then cast only the folded weight / activations.
    scale = bn_gamma / jnp.sqrt(bn_var + eps)                      # (C_out,)
    w_folded = weight[..., 0, 0] * scale[:, None, None]            # (C_out,C_in,KT)
    w_kt = jnp.transpose(w_folded, (2, 0, 1)).astype(compute_dtype)  # (KT,C_out,C_in)
    shift = (bn_beta + (bias - bn_mean) * scale).reshape(C_out, 1).astype(jnp.float32)

    C_tot = C_slow + C_out
    out_bytes = N * C_tot * T_out * HW * x_slow.dtype.itemsize
    cost = pl.CostEstimate(
        flops=2 * N * C_out * C_in * KT * T_out * HW,
        transcendentals=0,
        bytes_accessed=int(xf.size * xf.dtype.itemsize
                           + xs.size * xs.dtype.itemsize
                           + w_kt.size * w_kt.dtype.itemsize
                           + shift.size * 4 + out_bytes))

    kernel = functools.partial(
        _fuse_kernel, alpha=alpha, kt=KT, pad=pad, t_in=T, t_out=T_out,
        c_slow=C_slow, c_out=C_out, hw_tile=hw_tile)

    out = pl.pallas_call(
        kernel,
        out_shape=jax.ShapeDtypeStruct((N, C_tot, T_out, HW), x_slow.dtype),
        grid=(N, n_hw),
        in_specs=[
            pl.BlockSpec((None, C_in, T, hw_tile), lambda n, j: (n, 0, 0, j)),
            pl.BlockSpec((KT, C_out, C_in), lambda n, j: (0, 0, 0)),
            pl.BlockSpec((C_out, 1), lambda n, j: (0, 0)),
            pl.BlockSpec(memory_space=pl.ANY),   # x_slow stays in HBM (DMA'd)
        ],
        out_specs=pl.BlockSpec((None, C_tot, T_out, hw_tile),
                               lambda n, j: (n, 0, 0, j)),
        scratch_shapes=[pltpu.SemaphoreType.DMA],
        compiler_params=pltpu.CompilerParams(
            dimension_semantics=("parallel", "parallel"),
            vmem_limit_bytes=32 * 1024 * 1024),
        cost_estimate=cost,
    )(xf, w_kt, shift, xs)

    # Metadata-only reshape back to NCTHW; x_fast passes through untouched.
    return out.reshape(N, C_tot, T_out, H, W), x_fast


# ----------------------------- Reference (JAX) ------------------------------ #
def _reference(x_slow, x_fast, weight, bias, gamma, beta, mean, var, *, alpha, eps):
    pad = weight.shape[2] // 2
    conv = lax.conv_general_dilated(
        x_fast, weight, window_strides=(alpha, 1, 1),
        padding=[(pad, pad), (0, 0), (0, 0)],
        dimension_numbers=("NCDHW", "OIDHW", "NCDHW"))
    conv = conv + bias.reshape(1, -1, 1, 1, 1)
    bn = (conv - mean.reshape(1, -1, 1, 1, 1)) / jnp.sqrt(
        var.reshape(1, -1, 1, 1, 1) + eps) * gamma.reshape(1, -1, 1, 1, 1) \
        + beta.reshape(1, -1, 1, 1, 1)
    fuse = jnp.maximum(bn, 0.0)
    return jnp.concatenate([x_slow, fuse], axis=1), x_fast


# --------------------------------- Main ------------------------------------- #
if __name__ == "__main__":
    # Synthetic SlowFast config:
    #   dim_in (fast channels) = 4, CONV_CHANNEL_RATIO = 2 -> dim_out = 8
    #   KERNEL_SIZE = 5 -> padding = 2, ALPHA = 4, BN.EPS = 1e-5
    C_in, ratio, KT, ALPHA, EPS = 4, 2, 5, 4, 1e-5
    C_out = C_in * ratio
    N, T_fast, H, W = 2, 16, 16, 16          # HW = 256 -> two 128-lane tiles
    T_slow = T_fast // ALPHA                 # 4, matches conv T_out
    C_slow = 16

    key = jax.random.PRNGKey(0)
    ks = jax.random.split(key, 8)
    x_slow = jax.random.normal(ks[0], (N, C_slow, T_slow, H, W), jnp.float32)
    x_fast = jax.random.normal(ks[1], (N, C_in, T_fast, H, W), jnp.float32)
    weight = jax.random.normal(ks[2], (C_out, C_in, KT, 1, 1), jnp.float32) * 0.1
    bias = jax.random.normal(ks[3], (C_out,), jnp.float32) * 0.1
    bn_gamma = jax.random.uniform(ks[4], (C_out,), jnp.float32, 0.5, 1.5)
    bn_beta = jax.random.normal(ks[5], (C_out,), jnp.float32) * 0.1
    bn_mean = jax.random.normal(ks[6], (C_out,), jnp.float32) * 0.1
    bn_var = jax.random.uniform(ks[7], (C_out,), jnp.float32, 0.5, 1.5)

    out, passthrough = fuse_fast_to_slow(
        x_slow, x_fast, weight, bias, bn_gamma, bn_beta, bn_mean, bn_var,
        alpha=ALPHA, eps=EPS, hw_tile=128, compute_dtype=jnp.bfloat16)
    out = jax.block_until_ready(out)
    passthrough = jax.block_until_ready(passthrough)

    ref_out, ref_pass = _reference(
        x_slow, x_fast, weight, bias, bn_gamma, bn_beta, bn_mean, bn_var,
        alpha=ALPHA, eps=EPS)

    assert out.shape == (N, C_slow + C_out, T_slow, H, W)
    # Slow-pathway slab is a bit-exact pass-through (async DMA copy).
    np.testing.assert_array_equal(np.asarray(out[:, :C_slow]),
                                  np.asarray(ref_out[:, :C_slow]))
    # Fused slab: bf16 inputs / f32 accumulation vs f32 reference.
    np.testing.assert_allclose(np.asarray(out[:, C_slow:]),
                               np.asarray(ref_out[:, C_slow:]),
                               rtol=3e-2, atol=3e-2)
    np.testing.assert_array_equal(np.asarray(passthrough), np.asarray(ref_pass))
    print("KERNEL_OK")
</pallas_src>

<mosaic_0001>
module attributes {stable_mosaic.version = 11 : i64} {
  func.func @_fuse_kernel(%arg0: i32, %arg1: i32, %arg2: memref<1x4x16x128xbf16, #tpu.memory_space<vmem>>, %arg3: memref<5x8x4xbf16, #tpu.memory_space<vmem>>, %arg4: memref<8x1xf32, #tpu.memory_space<vmem>>, %arg5: memref<2x16x4x256xf32, #tpu.memory_space<any>>, %arg6: memref<1x24x4x128xf32, #tpu.memory_space<vmem>>, %arg7: memref<!tpu.dma_semaphore, #tpu.memory_space<semaphore_mem>>) attributes {dimension_semantics = [#tpu.dimension_semantics<parallel>, #tpu.dimension_semantics<parallel>], iteration_bounds = array<i64: 2, 2>, scalar_prefetch = 0 : i64, scratch_operands = 1 : i64, tpu.core_type = #tpu.core_type<tc>, window_params = [{transform_indices = @transform_0, window_bounds = array<i64: 1, 4, 16, 128>}, {pipeline_mode = #tpu.pipeline_mode<synchronous>, transform_indices = @transform_1, window_bounds = array<i64: 5, 8, 4>}, {pipeline_mode = #tpu.pipeline_mode<synchronous>, transform_indices = @transform_2, window_bounds = array<i64: 8, 1>}, {}, {transform_indices = @transform_4, window_bounds = array<i64: 1, 24, 4, 128>}]} {
    %c128_i32 = arith.constant 128 : i32
    %0 = arith.muli %arg1, %c128_i32 : i32
    %1 = tpu.assume_multiple %0, 128 : i32
    %c0_i32 = arith.constant 0 : i32
    %c0_i32_0 = arith.constant 0 : i32
    %2 = tpu.memref_slice %arg5[%arg0, %c0_i32, %c0_i32_0, %1] : memref<2x16x4x256xf32, #tpu.memory_space<any>> -> memref<1x16x4x128xf32, #tpu.memory_space<any>>
    %3 = tpu.memref_squeeze %2 : memref<1x16x4x128xf32, #tpu.memory_space<any>> -> memref<16x4x128xf32, #tpu.memory_space<any>>
    %c0_i32_1 = arith.constant 0 : i32
    %c0_i32_2 = arith.constant 0 : i32
    %c0_i32_3 = arith.constant 0 : i32
    %c0_i32_4 = arith.constant 0 : i32
    %4 = tpu.memref_slice %arg6[%c0_i32_1, %c0_i32_2, %c0_i32_3, %c0_i32_4] : memref<1x24x4x128xf32, #tpu.memory_space<vmem>> -> memref<1x16x4x128xf32, #tpu.memory_space<vmem>>
    %5 = tpu.memref_squeeze %4 : memref<1x16x4x128xf32, #tpu.memory_space<vmem>> -> memref<16x4x128xf32, #tpu.memory_space<vmem>>
    tpu.enqueue_dma source(%3 : memref<16x4x128xf32, #tpu.memory_space<any>>) target(%5 : memref<16x4x128xf32, #tpu.memory_space<vmem>>) target_semaphore(%arg7 : memref<!tpu.dma_semaphore, #tpu.memory_space<semaphore_mem>>)
    %c0 = arith.constant 0 : index
    %c0_5 = arith.constant 0 : index
    %6 = vector.load %arg4[%c0, %c0_5] : memref<8x1xf32, #tpu.memory_space<vmem>>, vector<8x1xf32>
    %cst = arith.constant 0.000000e+00 : f32
    %7 = vector.broadcast %cst : f32 to vector<8x128xf32>
    %c2 = arith.constant 2 : index
    %c0_6 = arith.constant 0 : index
    %c0_7 = arith.constant 0 : index
    %8 = vector.load %arg3[%c2, %c0_6, %c0_7] : memref<5x8x4xbf16, #tpu.memory_space<vmem>>, vector<1x8x4xbf16>
    %9 = vector.shape_cast %8 : vector<1x8x4xbf16> to vector<8x4xbf16>
    %c0_8 = arith.constant 0 : index
    %c0_9 = arith.constant 0 : index
    %c0_10 = arith.constant 0 : index
    %c0_11 = arith.constant 0 : index
    %10 = vector.load %arg2[%c0_8, %c0_9, %c0_10, %c0_11] : memref<1x4x16x128xbf16, #tpu.memory_space<vmem>>, vector<1x4x1x128xbf16>
    %11 = vector.shape_cast %10 : vector<1x4x1x128xbf16> to vector<4x128xbf16>
    %cst_12 = arith.constant dense<0.000000e+00> : vector<8x128xf32>
    %12 = tpu.matmul %9, %11, %cst_12 {dimension_numbers = #tpu.dot_dimension_numbers<[1], [0], [0], [1], [0, 0, 1, 1], [], []>} : vector<8x4xbf16>, vector<4x128xbf16>, vector<8x128xf32> -> vector<8x128xf32>
    %13 = arith.addf %7, %12 : vector<8x128xf32>
    %c3 = arith.constant 3 : index
    %c0_13 = arith.constant 0 : index
    %c0_14 = arith.constant 0 : index
    %14 = vector.load %arg3[%c3, %c0_13, %c0_14] : memref<5x8x4xbf16, #tpu.memory_space<vmem>>, vector<1x8x4xbf16>
    %15 = vector.shape_cast %14 : vector<1x8x4xbf16> to vector<8x4xbf16>
    %c0_15 = arith.constant 0 : index
    %c0_16 = arith.constant 0 : index
    %c1 = arith.constant 1 : index
    %c0_17 = arith.constant 0 : index
    %16 = vector.load %arg2[%c0_15, %c0_16, %c1, %c0_17] : memref<1x4x16x128xbf16, #tpu.memory_space<vmem>>, vector<1x4x1x128xbf16>
    %17 = vector.shape_cast %16 : vector<1x4x1x128xbf16> to vector<4x128xbf16>
    %cst_18 = arith.constant dense<0.000000e+00> : vector<8x128xf32>
    %18 = tpu.matmul %15, %17, %cst_18 {dimension_numbers = #tpu.dot_dimension_numbers<[1], [0], [0], [1], [0, 0, 1, 1], [], []>} : vector<8x4xbf16>, vector<4x128xbf16>, vector<8x128xf32> -> vector<8x128xf32>
    %19 = arith.addf %13, %18 : vector<8x128xf32>
    %c4 = arith.constant 4 : index
    %c0_19 = arith.constant 0 : index
    %c0_20 = arith.constant 0 : index
    %20 = vector.load %arg3[%c4, %c0_19, %c0_20] : memref<5x8x4xbf16, #tpu.memory_space<vmem>>, vector<1x8x4xbf16>
    %21 = vector.shape_cast %20 : vector<1x8x4xbf16> to vector<8x4xbf16>
    %c0_21 = arith.constant 0 : index
    %c0_22 = arith.constant 0 : index
    %c2_23 = arith.constant 2 : index
    %c0_24 = arith.constant 0 : index
    %22 = vector.load %arg2[%c0_21, %c0_22, %c2_23, %c0_24] : memref<1x4x16x128xbf16, #tpu.memory_space<vmem>>, vector<1x4x1x128xbf16>
    %23 = vector.shape_cast %22 : vector<1x4x1x128xbf16> to vector<4x128xbf16>
    %cst_25 = arith.constant dense<0.000000e+00> : vector<8x128xf32>
    %24 = tpu.matmul %21, %23, %cst_25 {dimension_numbers = #tpu.dot_dimension_numbers<[1], [0], [0], [1], [0, 0, 1, 1], [], []>} : vector<8x4xbf16>, vector<4x128xbf16>, vector<8x128xf32> -> vector<8x128xf32>
    %25 = arith.addf %19, %24 : vector<8x128xf32>
    %26 = vector.broadcast %6 : vector<8x1xf32> to vector<8x128xf32>
    %27 = arith.addf %25, %26 : vector<8x128xf32>
    %cst_26 = arith.constant 0.000000e+00 : f32
    %28 = vector.broadcast %cst_26 : f32 to vector<8x128xf32>
    %29 = arith.maximumf %27, %28 : vector<8x128xf32>
    %c0_27 = arith.constant 0 : index
    %c16 = arith.constant 16 : index
    %c0_28 = arith.constant 0 : index
    %c0_29 = arith.constant 0 : index
    %30 = vector.load %arg6[%c0_27, %c16, %c0_28, %c0_29] : memref<1x24x4x128xf32, #tpu.memory_space<vmem>>, vector<1x8x1x128xf32>
    %31 = vector.shape_cast %30 : vector<1x8x1x128xf32> to vector<8x128xf32>
    %32 = vector.shape_cast %29 : vector<8x128xf32> to vector<1x8x1x128xf32>
    tpu.vector_store %arg6[%c0_27, %c16, %c0_28, %c0_29], %32 {strides = array<i32>} : memref<1x24x4x128xf32, #tpu.memory_space<vmem>>, vector<1x8x1x128xf32>,
    %cst_30 = arith.constant 0.000000e+00 : f32
    %33 = vector.broadcast %cst_30 : f32 to vector<8x128xf32>
    %c0_31 = arith.constant 0 : index
    %c0_32 = arith.constant 0 : index
    %c0_33 = arith.constant 0 : index
    %34 = vector.load %arg3[%c0_31, %c0_32, %c0_33] : memref<5x8x4xbf16, #tpu.memory_space<vmem>>, vector<1x8x4xbf16>
    %35 = vector.shape_cast %34 : vector<1x8x4xbf16> to vector<8x4xbf16>
    %c0_34 = arith.constant 0 : index
    %c0_35 = arith.constant 0 : index
    %c2_36 = arith.constant 2 : index
    %c0_37 = arith.constant 0 : index
    %36 = vector.load %arg2[%c0_34, %c0_35, %c2_36, %c0_37] : memref<1x4x16x128xbf16, #tpu.memory_space<vmem>>, vector<1x4x1x128xbf16>
    %37 = vector.shape_cast %36 : vector<1x4x1x128xbf16> to vector<4x128xbf16>
    %cst_38 = arith.constant dense<0.000000e+00> : vector<8x128xf32>
    %38 = tpu.matmul %35, %37, %cst_38 {dimension_numbers = #tpu.dot_dimension_numbers<[1], [0], [0], [1], [0, 0, 1, 1], [], []>} : vector<8x4xbf16>, vector<4x128xbf16>, vector<8x128xf32> -> vector<8x128xf32>
    %39 = arith.addf %33, %38 : vector<8x128xf32>
    %c1_39 = arith.constant 1 : index
    %c0_40 = arith.constant 0 : index
    %c0_41 = arith.constant 0 : index
    %40 = vector.load %arg3[%c1_39, %c0_40, %c0_41] : memref<5x8x4xbf16, #tpu.memory_space<vmem>>, vector<1x8x4xbf16>
    %41 = vector.shape_cast %40 : vector<1x8x4xbf16> to vector<8x4xbf16>
    %c0_42 = arith.constant 0 : index
    %c0_43 = arith.constant 0 : index
    %c3_44 = arith.constant 3 : index
    %c0_45 = arith.constant 0 : index
    %42 = vector.load %arg2[%c0_42, %c0_43, %c3_44, %c0_45] : memref<1x4x16x128xbf16, #tpu.memory_space<vmem>>, vector<1x4x1x128xbf16>
    %43 = vector.shape_cast %42 : vector<1x4x1x128xbf16> to vector<4x128xbf16>
    %cst_46 = arith.constant dense<0.000000e+00> : vector<8x128xf32>
    %44 = tpu.matmul %41, %43, %cst_46 {dimension_numbers = #tpu.dot_dimension_numbers<[1], [0], [0], [1], [0, 0, 1, 1], [], []>} : vector<8x4xbf16>, vector<4x128xbf16>, vector<8x128xf32> -> vector<8x128xf32>
    %45 = arith.addf %39, %44 : vector<8x128xf32>
    %c2_47 = arith.constant 2 : index
    %c0_48 = arith.constant 0 : index
    %c0_49 = arith.constant 0 : index
    %46 = vector.load %arg3[%c2_47, %c0_48, %c0_49] : memref<5x8x4xbf16, #tpu.memory_space<vmem>>, vector<1x8x4xbf16>
    %47 = vector.shape_cast %46 : vector<1x8x4xbf16> to vector<8x4xbf16>
    %c0_50 = arith.constant 0 : index
    %c0_51 = arith.constant 0 : index
    %c4_52 = arith.constant 4 : index
    %c0_53 = arith.constant 0 : index
    %48 = vector.load %arg2[%c0_50, %c0_51, %c4_52, %c0_53] : memref<1x4x16x128xbf16, #tpu.memory_space<vmem>>, vector<1x4x1x128xbf16>
    %49 = vector.shape_cast %48 : vector<1x4x1x128xbf16> to vector<4x128xbf16>
    %cst_54 = arith.constant dense<0.000000e+00> : vector<8x128xf32>
    %50 = tpu.matmul %47, %49, %cst_54 {dimension_numbers = #tpu.dot_dimension_numbers<[1], [0], [0], [1], [0, 0, 1, 1], [], []>} : vector<8x4xbf16>, vector<4x128xbf16>, vector<8x128xf32> -> vector<8x128xf32>
    %51 = arith.addf %45, %50 : vector<8x128xf32>
    %c3_55 = arith.constant 3 : index
    %c0_56 = arith.constant 0 : index
    %c0_57 = arith.constant 0 : index
    %52 = vector.load %arg3[%c3_55, %c0_56, %c0_57] : memref<5x8x4xbf16, #tpu.memory_space<vmem>>, vector<1x8x4xbf16>
    %53 = vector.shape_cast %52 : vector<1x8x4xbf16> to vector<8x4xbf16>
    %c0_58 = arith.constant 0 : index
    %c0_59 = arith.constant 0 : index
    %c5 = arith.constant 5 : index
    %c0_60 = arith.constant 0 : index
    %54 = vector.load %arg2[%c0_58, %c0_59, %c5, %c0_60] : memref<1x4x16x128xbf16, #tpu.memory_space<vmem>>, vector<1x4x1x128xbf16>
    %55 = vector.shape_cast %54 : vector<1x4x1x128xbf16> to vector<4x128xbf16>
    %cst_61 = arith.constant dense<0.000000e+00> : vector<8x128xf32>
    %56 = tpu.matmul %53, %55, %cst_61 {dimension_numbers = #tpu.dot_dimension_numbers<[1], [0], [0], [1], [0, 0, 1, 1], [], []>} : vector<8x4xbf16>, vector<4x128xbf16>, vector<8x128xf32> -> vector<8x128xf32>
    %57 = arith.addf %51, %56 : vector<8x128xf32>
    %c4_62 = arith.constant 4 : index
    %c0_63 = arith.constant 0 : index
    %c0_64 = arith.constant 0 : index
    %58 = vector.load %arg3[%c4_62, %c0_63, %c0_64] : memref<5x8x4xbf16, #tpu.memory_space<vmem>>, vector<1x8x4xbf16>
    %59 = vector.shape_cast %58 : vector<1x8x4xbf16> to vector<8x4xbf16>
    %c0_65 = arith.constant 0 : index
    %c0_66 = arith.constant 0 : index
    %c6 = arith.constant 6 : index
    %c0_67 = arith.constant 0 : index
    %60 = vector.load %arg2[%c0_65, %c0_66, %c6, %c0_67] : memref<1x4x16x128xbf16, #tpu.memory_space<vmem>>, vector<1x4x1x128xbf16>
    %61 = vector.shape_cast %60 : vector<1x4x1x128xbf16> to vector<4x128xbf16>
    %cst_68 = arith.constant dense<0.000000e+00> : vector<8x128xf32>
    %62 = tpu.matmul %59, %61, %cst_68 {dimension_numbers = #tpu.dot_dimension_numbers<[1], [0], [0], [1], [0, 0, 1, 1], [], []>} : vector<8x4xbf16>, vector<4x128xbf16>, vector<8x128xf32> -> vector<8x128xf32>
    %63 = arith.addf %57, %62 : vector<8x128xf32>
    %64 = vector.broadcast %6 : vector<8x1xf32> to vector<8x128xf32>
    %65 = arith.addf %63, %64 : vector<8x128xf32>
    %cst_69 = arith.constant 0.000000e+00 : f32
    %66 = vector.broadcast %cst_69 : f32 to vector<8x128xf32>
    %67 = arith.maximumf %65, %66 : vector<8x128xf32>
    %c0_70 = arith.constant 0 : index
    %c16_71 = arith.constant 16 : index
    %c1_72 = arith.constant 1 : index
    %c0_73 = arith.constant 0 : index
    %68 = vector.load %arg6[%c0_70, %c16_71, %c1_72, %c0_73] : memref<1x24x4x128xf32, #tpu.memory_space<vmem>>, vector<1x8x1x128xf32>
    %69 = vector.shape_cast %68 : vector<1x8x1x128xf32> to vector<8x128xf32>
    %70 = vector.shape_cast %67 : vector<8x128xf32> to vector<1x8x1x128xf32>
    tpu.vector_store %arg6[%c0_70, %c16_71, %c1_72, %c0_73], %70 {strides = array<i32>} : memref<1x24x4x128xf32, #tpu.memory_space<vmem>>, vector<1x8x1x128xf32>,
    %cst_74 = arith.constant 0.000000e+00 : f32
    %71 = vector.broadcast %cst_74 : f32 to vector<8x128xf32>
    %c0_75 = arith.constant 0 : index
    %c0_76 = arith.constant 0 : index
    %c0_77 = arith.constant 0 : index
    %72 = vector.load %arg3[%c0_75, %c0_76, %c0_77] : memref<5x8x4xbf16, #tpu.memory_space<vmem>>, vector<1x8x4xbf16>
    %73 = vector.shape_cast %72 : vector<1x8x4xbf16> to vector<8x4xbf16>
    %c0_78 = arith.constant 0 : index
    %c0_79 = arith.constant 0 : index
    %c6_80 = arith.constant 6 : index
    %c0_81 = arith.constant 0 : index
    %74 = vector.load %arg2[%c0_78, %c0_79, %c6_80, %c0_81] : memref<1x4x16x128xbf16, #tpu.memory_space<vmem>>, vector<1x4x1x128xbf16>
    %75 = vector.shape_cast %74 : vector<1x4x1x128xbf16> to vector<4x128xbf16>
    %cst_82 = arith.constant dense<0.000000e+00> : vector<8x128xf32>
    %76 = tpu.matmul %73, %75, %cst_82 {dimension_numbers = #tpu.dot_dimension_numbers<[1], [0], [0], [1], [0, 0, 1, 1], [], []>} : vector<8x4xbf16>, vector<4x128xbf16>, vector<8x128xf32> -> vector<8x128xf32>
    %77 = arith.addf %71, %76 : vector<8x128xf32>
    %c1_83 = arith.constant 1 : index
    %c0_84 = arith.constant 0 : index
    %c0_85 = arith.constant 0 : index
    %78 = vector.load %arg3[%c1_83, %c0_84, %c0_85] : memref<5x8x4xbf16, #tpu.memory_space<vmem>>, vector<1x8x4xbf16>
    %79 = vector.shape_cast %78 : vector<1x8x4xbf16> to vector<8x4xbf16>
    %c0_86 = arith.constant 0 : index
    %c0_87 = arith.constant 0 : index
    %c7 = arith.constant 7 : index
    %c0_88 = arith.constant 0 : index
    %80 = vector.load %arg2[%c0_86, %c0_87, %c7, %c0_88] : memref<1x4x16x128xbf16, #tpu.memory_space<vmem>>, vector<1x4x1x128xbf16>
    %81 = vector.shape_cast %80 : vector<1x4x1x128xbf16> to vector<4x128xbf16>
    %cst_89 = arith.constant dense<0.000000e+00> : vector<8x128xf32>
    %82 = tpu.matmul %79, %81, %cst_89 {dimension_numbers = #tpu.dot_dimension_numbers<[1], [0], [0], [1], [0, 0, 1, 1], [], []>} : vector<8x4xbf16>, vector<4x128xbf16>, vector<8x128xf32> -> vector<8x128xf32>
    %83 = arith.addf %77, %82 : vector<8x128xf32>
    %c2_90 = arith.constant 2 : index
    %c0_91 = arith.constant 0 : index
    %c0_92 = arith.constant 0 : index
    %84 = vector.load %arg3[%c2_90, %c0_91, %c0_92] : memref<5x8x4xbf16, #tpu.memory_space<vmem>>, vector<1x8x4xbf16>
    %85 = vector.shape_cast %84 : vector<1x8x4xbf16> to vector<8x4xbf16>
    %c0_93 = arith.constant 0 : index
    %c0_94 = arith.constant 0 : index
    %c8 = arith.constant 8 : index
    %c0_95 = arith.constant 0 : index
    %86 = vector.load %arg2[%c0_93, %c0_94, %c8, %c0_95] : memref<1x4x16x128xbf16, #tpu.memory_space<vmem>>, vector<1x4x1x128xbf16>
    %87 = vector.shape_cast %86 : vector<1x4x1x128xbf16> to vector<4x128xbf16>
    %cst_96 = arith.constant dense<0.000000e+00> : vector<8x128xf32>
    %88 = tpu.matmul %85, %87, %cst_96 {dimension_numbers = #tpu.dot_dimension_numbers<[1], [0], [0], [1], [0, 0, 1, 1], [], []>} : vector<8x4xbf16>, vector<4x128xbf16>, vector<8x128xf32> -> vector<8x128xf32>
    %89 = arith.addf %83, %88 : vector<8x128xf32>
    %c3_97 = arith.constant 3 : index
    %c0_98 = arith.constant 0 : index
    %c0_99 = arith.constant 0 : index
    %90 = vector.load %arg3[%c3_97, %c0_98, %c0_99] : memref<5x8x4xbf16, #tpu.memory_space<vmem>>, vector<1x8x4xbf16>
    %91 = vector.shape_cast %90 : vector<1x8x4xbf16> to vector<8x4xbf16>
    %c0_100 = arith.constant 0 : index
    %c0_101 = arith.constant 0 : index
    %c9 = arith.constant 9 : index
    %c0_102 = arith.constant 0 : index
    %92 = vector.load %arg2[%c0_100, %c0_101, %c9, %c0_102] : memref<1x4x16x128xbf16, #tpu.memory_space<vmem>>, vector<1x4x1x128xbf16>
    %93 = vector.shape_cast %92 : vector<1x4x1x128xbf16> to vector<4x128xbf16>
    %cst_103 = arith.constant dense<0.000000e+00> : vector<8x128xf32>
    %94 = tpu.matmul %91, %93, %cst_103 {dimension_numbers = #tpu.dot_dimension_numbers<[1], [0], [0], [1], [0, 0, 1, 1], [], []>} : vector<8x4xbf16>, vector<4x128xbf16>, vector<8x128xf32> -> vector<8x128xf32>
    %95 = arith.addf %89, %94 : vector<8x128xf32>
    %c4_104 = arith.constant 4 : index
    %c0_105 = arith.constant 0 : index
    %c0_106 = arith.constant 0 : index
    %96 = vector.load %arg3[%c4_104, %c0_105, %c0_106] : memref<5x8x4xbf16, #tpu.memory_space<vmem>>, vector<1x8x4xbf16>
    %97 = vector.shape_cast %96 : vector<1x8x4xbf16> to vector<8x4xbf16>
    %c0_107 = arith.constant 0 : index
    %c0_108 = arith.constant 0 : index
    %c10 = arith.constant 10 : index
    %c0_109 = arith.constant 0 : index
    %98 = vector.load %arg2[%c0_107, %c0_108, %c10, %c0_109] : memref<1x4x16x128xbf16, #tpu.memory_space<vmem>>, vector<1x4x1x128xbf16>
    %99 = vector.shape_cast %98 : vector<1x4x1x128xbf16> to vector<4x128xbf16>
    %cst_110 = arith.constant dense<0.000000e+00> : vector<8x128xf32>
    %100 = tpu.matmul %97, %99, %cst_110 {dimension_numbers = #tpu.dot_dimension_numbers<[1], [0], [0], [1], [0, 0, 1, 1], [], []>} : vector<8x4xbf16>, vector<4x128xbf16>, vector<8x128xf32> -> vector<8x128xf32>
    %101 = arith.addf %95, %100 : vector<8x128xf32>
    %102 = vector.broadcast %6 : vector<8x1xf32> to vector<8x128xf32>
    %103 = arith.addf %101, %102 : vector<8x128xf32>
    %cst_111 = arith.constant 0.000000e+00 : f32
    %104 = vector.broadcast %cst_111 : f32 to vector<8x128xf32>
    %105 = arith.maximumf %103, %104 : vector<8x128xf32>
    %c0_112 = arith.constant 0 : index
    %c16_113 = arith.constant 16 : index
    %c2_114 = arith.constant 2 : index
    %c0_115 = arith.constant 0 : index
    %106 = vector.load %arg6[%c0_112, %c16_113, %c2_114, %c0_115] : memref<1x24x4x128xf32, #tpu.memory_space<vmem>>, vector<1x8x1x128xf32>
    %107 = vector.shape_cast %106 : vector<1x8x1x128xf32> to vector<8x128xf32>
    %108 = vector.shape_cast %105 : vector<8x128xf32> to vector<1x8x1x128xf32>
    tpu.vector_store %arg6[%c0_112, %c16_113, %c2_114, %c0_115], %108 {strides = array<i32>} : memref<1x24x4x128xf32, #tpu.memory_space<vmem>>, vector<1x8x1x128xf32>,
    %cst_116 = arith.constant 0.000000e+00 : f32
    %109 = vector.broadcast %cst_116 : f32 to vector<8x128xf32>
    %c0_117 = arith.constant 0 : index
    %c0_118 = arith.constant 0 : index
    %c0_119 = arith.constant 0 : index
    %110 = vector.load %arg3[%c0_117, %c0_118, %c0_119] : memref<5x8x4xbf16, #tpu.memory_space<vmem>>, vector<1x8x4xbf16>
    %111 = vector.shape_cast %110 : vector<1x8x4xbf16> to vector<8x4xbf16>
    %c0_120 = arith.constant 0 : index
    %c0_121 = arith.constant 0 : index
    %c10_122 = arith.constant 10 : index
    %c0_123 = arith.constant 0 : index
    %112 = vector.load %arg2[%c0_120, %c0_121, %c10_122, %c0_123] : memref<1x4x16x128xbf16, #tpu.memory_space<vmem>>, vector<1x4x1x128xbf16>
    %113 = vector.shape_cast %112 : vector<1x4x1x128xbf16> to vector<4x128xbf16>
    %cst_124 = arith.constant dense<0.000000e+00> : vector<8x128xf32>
    %114 = tpu.matmul %111, %113, %cst_124 {dimension_numbers = #tpu.dot_dimension_numbers<[1], [0], [0], [1], [0, 0, 1, 1], [], []>} : vector<8x4xbf16>, vector<4x128xbf16>, vector<8x128xf32> -> vector<8x128xf32>
    %115 = arith.addf %109, %114 : vector<8x128xf32>
    %c1_125 = arith.constant 1 : index
    %c0_126 = arith.constant 0 : index
    %c0_127 = arith.constant 0 : index
    %116 = vector.load %arg3[%c1_125, %c0_126, %c0_127] : memref<5x8x4xbf16, #tpu.memory_space<vmem>>, vector<1x8x4xbf16>
    %117 = vector.shape_cast %116 : vector<1x8x4xbf16> to vector<8x4xbf16>
    %c0_128 = arith.constant 0 : index
    %c0_129 = arith.constant 0 : index
    %c11 = arith.constant 11 : index
    %c0_130 = arith.constant 0 : index
    %118 = vector.load %arg2[%c0_128, %c0_129, %c11, %c0_130] : memref<1x4x16x128xbf16, #tpu.memory_space<vmem>>, vector<1x4x1x128xbf16>
    %119 = vector.shape_cast %118 : vector<1x4x1x128xbf16> to vector<4x128xbf16>
    %cst_131 = arith.constant dense<0.000000e+00> : vector<8x128xf32>
    %120 = tpu.matmul %117, %119, %cst_131 {dimension_numbers = #tpu.dot_dimension_numbers<[1], [0], [0], [1], [0, 0, 1, 1], [], []>} : vector<8x4xbf16>, vector<4x128xbf16>, vector<8x128xf32> -> vector<8x128xf32>
    %121 = arith.addf %115, %120 : vector<8x128xf32>
    %c2_132 = arith.constant 2 : index
    %c0_133 = arith.constant 0 : index
    %c0_134 = arith.constant 0 : index
    %122 = vector.load %arg3[%c2_132, %c0_133, %c0_134] : memref<5x8x4xbf16, #tpu.memory_space<vmem>>, vector<1x8x4xbf16>
    %123 = vector.shape_cast %122 : vector<1x8x4xbf16> to vector<8x4xbf16>
    %c0_135 = arith.constant 0 : index
    %c0_136 = arith.constant 0 : index
    %c12 = arith.constant 12 : index
    %c0_137 = arith.constant 0 : index
    %124 = vector.load %arg2[%c0_135, %c0_136, %c12, %c0_137] : memref<1x4x16x128xbf16, #tpu.memory_space<vmem>>, vector<1x4x1x128xbf16>
    %125 = vector.shape_cast %124 : vector<1x4x1x128xbf16> to vector<4x128xbf16>
    %cst_138 = arith.constant dense<0.000000e+00> : vector<8x128xf32>
    %126 = tpu.matmul %123, %125, %cst_138 {dimension_numbers = #tpu.dot_dimension_numbers<[1], [0], [0], [1], [0, 0, 1, 1], [], []>} : vector<8x4xbf16>, vector<4x128xbf16>, vector<8x128xf32> -> vector<8x128xf32>
    %127 = arith.addf %121, %126 : vector<8x128xf32>
    %c3_139 = arith.constant 3 : index
    %c0_140 = arith.constant 0 : index
    %c0_141 = arith.constant 0 : index
    %128 = vector.load %arg3[%c3_139, %c0_140, %c0_141] : memref<5x8x4xbf16, #tpu.memory_space<vmem>>, vector<1x8x4xbf16>
    %129 = vector.shape_cast %128 : vector<1x8x4xbf16> to vector<8x4xbf16>
    %c0_142 = arith.constant 0 : index
    %c0_143 = arith.constant 0 : index
    %c13 = arith.constant 13 : index
    %c0_144 = arith.constant 0 : index
    %130 = vector.load %arg2[%c0_142, %c0_143, %c13, %c0_144] : memref<1x4x16x128xbf16, #tpu.memory_space<vmem>>, vector<1x4x1x128xbf16>
    %131 = vector.shape_cast %130 : vector<1x4x1x128xbf16> to vector<4x128xbf16>
    %cst_145 = arith.constant dense<0.000000e+00> : vector<8x128xf32>
    %132 = tpu.matmul %129, %131, %cst_145 {dimension_numbers = #tpu.dot_dimension_numbers<[1], [0], [0], [1], [0, 0, 1, 1], [], []>} : vector<8x4xbf16>, vector<4x128xbf16>, vector<8x128xf32> -> vector<8x128xf32>
    %133 = arith.addf %127, %132 : vector<8x128xf32>
    %c4_146 = arith.constant 4 : index
    %c0_147 = arith.constant 0 : index
    %c0_148 = arith.constant 0 : index
    %134 = vector.load %arg3[%c4_146, %c0_147, %c0_148] : memref<5x8x4xbf16, #tpu.memory_space<vmem>>, vector<1x8x4xbf16>
    %135 = vector.shape_cast %134 : vector<1x8x4xbf16> to vector<8x4xbf16>
    %c0_149 = arith.constant 0 : index
    %c0_150 = arith.constant 0 : index
    %c14 = arith.constant 14 : index
    %c0_151 = arith.constant 0 : index
    %136 = vector.load %arg2[%c0_149, %c0_150, %c14, %c0_151] : memref<1x4x16x128xbf16, #tpu.memory_space<vmem>>, vector<1x4x1x128xbf16>
    %137 = vector.shape_cast %136 : vector<1x4x1x128xbf16> to vector<4x128xbf16>
    %cst_152 = arith.constant dense<0.000000e+00> : vector<8x128xf32>
    %138 = tpu.matmul %135, %137, %cst_152 {dimension_numbers = #tpu.dot_dimension_numbers<[1], [0], [0], [1], [0, 0, 1, 1], [], []>} : vector<8x4xbf16>, vector<4x128xbf16>, vector<8x128xf32> -> vector<8x128xf32>
    %139 = arith.addf %133, %138 : vector<8x128xf32>
    %140 = vector.broadcast %6 : vector<8x1xf32> to vector<8x128xf32>
    %141 = arith.addf %139, %140 : vector<8x128xf32>
    %cst_153 = arith.constant 0.000000e+00 : f32
    %142 = vector.broadcast %cst_153 : f32 to vector<8x128xf32>
    %143 = arith.maximumf %141, %142 : vector<8x128xf32>
    %c0_154 = arith.constant 0 : index
    %c16_155 = arith.constant 16 : index
    %c3_156 = arith.constant 3 : index
    %c0_157 = arith.constant 0 : index
    %144 = vector.load %arg6[%c0_154, %c16_155, %c3_156, %c0_157] : memref<1x24x4x128xf32, #tpu.memory_space<vmem>>, vector<1x8x1x128xf32>
    %145 = vector.shape_cast %144 : vector<1x8x1x128xf32> to vector<8x128xf32>
    %146 = vector.shape_cast %143 : vector<8x128xf32> to vector<1x8x1x128xf32>
    tpu.vector_store %arg6[%c0_154, %c16_155, %c3_156, %c0_157], %146 {strides = array<i32>} : memref<1x24x4x128xf32, #tpu.memory_space<vmem>>, vector<1x8x1x128xf32>,
    %c0_i32_158 = arith.constant 0 : i32
    %c0_i32_159 = arith.constant 0 : i32
    %147 = tpu.memref_slice %arg5[%arg0, %c0_i32_158, %c0_i32_159, %1] : memref<2x16x4x256xf32, #tpu.memory_space<any>> -> memref<1x16x4x128xf32, #tpu.memory_space<any>>
    %148 = tpu.memref_squeeze %147 : memref<1x16x4x128xf32, #tpu.memory_space<any>> -> memref<16x4x128xf32, #tpu.memory_space<any>>
    %c0_i32_160 = arith.constant 0 : i32
    %c0_i32_161 = arith.constant 0 : i32
    %c0_i32_162 = arith.constant 0 : i32
    %c0_i32_163 = arith.constant 0 : i32
    %149 = tpu.memref_slice %arg6[%c0_i32_160, %c0_i32_161, %c0_i32_162, %c0_i32_163] : memref<1x24x4x128xf32, #tpu.memory_space<vmem>> -> memref<1x16x4x128xf32, #tpu.memory_space<vmem>>
    %150 = tpu.memref_squeeze %149 : memref<1x16x4x128xf32, #tpu.memory_space<vmem>> -> memref<16x4x128xf32, #tpu.memory_space<vmem>>
    tpu.wait_dma2 semaphore(%arg7 : memref<!tpu.dma_semaphore, #tpu.memory_space<semaphore_mem>>) src(%148 : memref<16x4x128xf32, #tpu.memory_space<any>>) dst(%150 : memref<16x4x128xf32, #tpu.memory_space<vmem>>)
    return
  }
  func.func @transform_0(%arg0: i32, %arg1: i32) -> (i32, i32, i32, i32) {
    %c0_i32 = arith.constant 0 : i32
    %c0_i32_0 = arith.constant 0 : i32
    %c0_i32_1 = arith.constant 0 : i32
    return %arg0, %c0_i32, %c0_i32_0, %arg1 : i32, i32, i32, i32
  }
  func.func @transform_1(%arg0: i32, %arg1: i32) -> (i32, i32, i32) {
    %c0_i32 = arith.constant 0 : i32
    %c0_i32_0 = arith.constant 0 : i32
    %c0_i32_1 = arith.constant 0 : i32
    %c0_i32_2 = arith.constant 0 : i32
    return %c0_i32, %c0_i32_0, %c0_i32_1 : i32, i32, i32
  }
  func.func @transform_2(%arg0: i32, %arg1: i32) -> (i32, i32) {
    %c0_i32 = arith.constant 0 : i32
    %c0_i32_0 = arith.constant 0 : i32
    %c0_i32_1 = arith.constant 0 : i32
    return %c0_i32, %c0_i32_0 : i32, i32
  }
  func.func @transform_4(%arg0: i32, %arg1: i32) -> (i32, i32, i32, i32) {
    %c0_i32 = arith.constant 0 : i32
    %c0_i32_0 = arith.constant 0 : i32
    %c0_i32_1 = arith.constant 0 : i32
    return %arg0, %c0_i32, %c0_i32_0, %arg1 : i32, i32, i32, i32
  }
}

</mosaic_0001>

<llo_original>
// kernel: tpu_custom_call.1
$region0: #{tpu_custom_call.1}
  #allocation0 [shape = 'u32[]', space=smem, size = 0x4, offset = 0x4, fixed_abs, tag = 'smem constant byte address 0x4 - core index']
  #allocation1 [shape = 'u32[144,128]{1,0:T(1,128)}', space=vmem, size = 0x12000, scoped, tag = 'internal scratch']
  #allocation2 [shape = 's32[1]{0}', space=sflag, size = 0x4, scoped, tag = 'scratch operand']
  #allocation7 [shape = 's32[]', space=sflag, size = 0x4, offset = 0, fixed_abs, tag = 'sflag constant byte address 0x0 - dummy sync flag']
  %s0 = inlined_call_operand.hbm [shape: bf16[2,4,16,256], index: 0, kind: input, shape index: {}]
  %s1 = inlined_call_operand.vmem [shape: bf16[5,8,4], index: 1, kind: input, shape index: {}]
  %s2 = inlined_call_operand.vmem [shape: f32[8,1], index: 2, kind: input, shape index: {}]
  %s3 = inlined_call_operand.hbm [shape: f32[2,16,4,256], index: 3, kind: input, shape index: {}]
  %s4 = inlined_call_operand.hbm [shape: f32[2,24,4,256], index: 4, kind: output, shape index: {}]
  %s5 = sld [smem:[#allocation0]]
  $region49: #{tpu_custom_call.1} parent=0
    _
  %s7 = ssub.s32 1, %s5
  %s8 = scalar_select 0, %s7, %s5
  $region1: #{tpu_custom_call.1} parent=0
    #allocation3 [shape = 'u8[32768]{0}', space=vmem, size = 0x8000, scoped, tag = 'input window, operand 0']
    #allocation4 [shape = 's32[2]{0}', space=sflag, size = 0x8, scoped, tag = 'scoped memory for tpu_custom_call.1']
    #allocation5 [shape = 's32[2]{0}', space=sflag, size = 0x8, scoped, tag = 'scoped memory for tpu_custom_call.1']
    #allocation6 [shape = 'u8[98304]{0}', space=vmem, size = 0x18000, scoped, tag = 'output window, operand 0']
    %9 = vsyncpa [#allocation4], 0
    %s10 = scalar_lea.sflag [#allocation4], 1
    %11 = vsyncpa %s10, 0
    %12 = vsyncpa [#allocation5], 0
    %s13 = scalar_lea.sflag [#allocation5], 1
    %14 = vsyncpa %s13, 0
    loop: start=0, step=1, limit=6
    $region2: #{tpu_custom_call.1} parent=1 // loop_pre_header
      _
    $region3: #{tpu_custom_call.1} parent=1 // loop_header
      %s16 = sphi 0, %s20
      %p17 = scmp.ge.s32.totalorder %s16, 6
      %s23 = sphi 0, %s35
      %s24 = sphi 0, %s31
      %s25 = sphi 0, %s23
      %s26 = sphi 0, %s24
      %s27 = sphi 0, %s25
      %s28 = sphi 0, %s26
      %s40 = sphi 0, %s42
      %s43 = sphi 0, %s40
      %s44 = sphi 0, %s43
      %s60 = sphi 0, %s44
      %s64 = sphi 0, %s64
      %s66 = sphi 0, %s64
      %s67 = sphi 0, %s66
      %s81 = sphi 0, %s67
      %s85 = sphi 0, %s85
      %s87 = sphi 0, %s85
      %s88 = sphi 0, %s87
      %s102 = sphi 0, %s88
      %s110 = sphi 0, %s112
      %s113 = sphi 0, %s110
      %s114 = sphi 0, %s113
      %s130 = sphi 0, %s114
    $region4: #{tpu_custom_call.1} parent=1 // loop_header_branch
      %19 = sbr.rel (%p17) target = $region8
    $region5: #{tpu_custom_call.1} parent=1 // loop_body
      %s21 = ssub.s32 %s16, 1
      %s22 = ssub.s32 %s16, 2
      %s29 = sadd.s32 1, %s24
      %p30 = scmp.ge.s32.totalorder %s29, 2
      %s31 = scalar_select %p30, 0, %s29
      %s32 = sadd.s32 1, %s23
      %s33 = scalar_select %p30, %s32, %s23
      %p34 = scmp.ge.s32.totalorder %s33, 2
      %s35 = scalar_select %p34, 0, %s33
      %s36 = ssub.s32 %s23, %s35
      %s37 = ssub.s32 %s24, %s31
      %s38 = sor.u32 %s36, %s37
      %p39 = scmp.eq.s32.totalorder %s38, 0
      %s41 = sadd.s32 %s40, 1
      %s42 = scalar_select %p39, %s40, %s41
      %p45 = pneg %p39
      %p46 = scmp.eq.s32.totalorder %s16, 3
      %p47 = por %p45, %p46
      %p48 = scmp.ne.s32.totalorder %s40, %s43
      %p49 = scmp.eq.s32.totalorder %s16, 0
      %p50 = por %p48, %p49
      %p51 = scmp.ne.s32.totalorder %s40, %s43
      %p52 = scmp.eq.s32.totalorder %s21, 3
      %p53 = por %p51, %p52
      %p54 = scmp.ne.s32.totalorder %s43, %s44
      %p55 = scmp.eq.s32.totalorder %s21, 0
      %p56 = por %p54, %p55
      %p57 = scmp.ne.s32.totalorder %s43, %s44
      %p58 = scmp.eq.s32.totalorder %s22, 3
      %p59 = por %p57, %p58
      %p61 = scmp.ne.s32.totalorder %s44, %s60
      %p62 = scmp.eq.s32.totalorder %s22, 0
      %p63 = por %p61, %p62
      %s65 = sadd.s32 %s64, 1
      %p68 = scmp.eq.s32.totalorder %s16, 3
      %p69 = scmp.ne.s32.totalorder %s64, %s66
      %p70 = scmp.eq.s32.totalorder %s16, 0
      %p71 = por %p69, %p70
      %p72 = scmp.ne.s32.totalorder %s64, %s66
      %p73 = scmp.eq.s32.totalorder %s21, 3
      %p74 = por %p72, %p73
      %p75 = scmp.ne.s32.totalorder %s66, %s67
      %p76 = scmp.eq.s32.totalorder %s21, 0
      %p77 = por %p75, %p76
      %p78 = scmp.ne.s32.totalorder %s66, %s67
      %p79 = scmp.eq.s32.totalorder %s22, 3
      %p80 = por %p78, %p79
      %p82 = scmp.ne.s32.totalorder %s67, %s81
      %p83 = scmp.eq.s32.totalorder %s22, 0
      %p84 = por %p82, %p83
      %s86 = sadd.s32 %s85, 1
      %p89 = scmp.eq.s32.totalorder %s16, 3
      %p90 = scmp.ne.s32.totalorder %s85, %s87
      %p91 = scmp.eq.s32.totalorder %s16, 0
      %p92 = por %p90, %p91
      %p93 = scmp.ne.s32.totalorder %s85, %s87
      %p94 = scmp.eq.s32.totalorder %s21, 3
      %p95 = por %p93, %p94
      %p96 = scmp.ne.s32.totalorder %s87, %s88
      %p97 = scmp.eq.s32.totalorder %s21, 0
      %p98 = por %p96, %p97
      %p99 = scmp.ne.s32.totalorder %s87, %s88
      %p100 = scmp.eq.s32.totalorder %s22, 3
      %p101 = por %p99, %p100
      %p103 = scmp.ne.s32.totalorder %s88, %s102
      %p104 = scmp.eq.s32.totalorder %s22, 0
      %p105 = por %p103, %p104
      %s106 = ssub.s32 %s23, %s35
      %s107 = ssub.s32 %s24, %s31
      %s108 = sor.u32 %s106, %s107
      %p109 = scmp.eq.s32.totalorder %s108, 0
      %s111 = sadd.s32 %s110, 1
      %s112 = scalar_select %p109, %s110, %s111
      %p115 = pneg %p109
      %p116 = scmp.eq.s32.totalorder %s16, 3
      %p117 = por %p115, %p116
      %p118 = scmp.ne.s32.totalorder %s110, %s113
      %p119 = scmp.eq.s32.totalorder %s16, 0
      %p120 = por %p118, %p119
      %p121 = scmp.ne.s32.totalorder %s110, %s113
      %p122 = scmp.eq.s32.totalorder %s21, 3
      %p123 = por %p121, %p122
      %p124 = scmp.ne.s32.totalorder %s113, %s114
      %p125 = scmp.eq.s32.totalorder %s21, 0
      %p126 = por %p124, %p125
      %p127 = scmp.ne.s32.totalorder %s113, %s114
      %p128 = scmp.eq.s32.totalorder %s22, 3
      %p129 = por %p127, %p128
      %p131 = scmp.ne.s32.totalorder %s114, %s130
      %p132 = scmp.eq.s32.totalorder %s22, 0
      %p133 = por %p131, %p132
      %p134 = scmp.le.s32.totalorder 1, %s16
      %p135 = scmp.lt.s32.totalorder %s16, 5
      %p136 = pnand %p134, %p135
      %p137 = pneg %p136
      // Predicated region
      $region9: #{tpu_custom_call.1} parent=5 // pred_check
        _
      $region10: #{tpu_custom_call.1} parent=5 // pred_check_branch
        %139 = sbr.rel (%p136) target = $region12
      $region11: #{tpu_custom_call.1} parent=5 // pred_region
        %s140 = ssub.s32 %s16, 1
        // Predicated region
        $region13: #{tpu_custom_call.1} parent=11 // pred_check
          %p141 = pneg %p77
        $region14: #{tpu_custom_call.1} parent=11 // pred_check_branch
          %143 = sbr.rel (%p141) target = $region16
        $region15: #{tpu_custom_call.1} parent=11 // pred_region
          _
        $region16: #{tpu_custom_call.1} parent=11 // pred_fallthru
          _
        // Predicated region
        $region17: #{tpu_custom_call.1} parent=11 // pred_check
          %p144 = pneg %p98
        $region18: #{tpu_custom_call.1} parent=11 // pred_check_branch
          %146 = sbr.rel (%p144) target = $region20
        $region19: #{tpu_custom_call.1} parent=11 // pred_region
          _
        $region20: #{tpu_custom_call.1} parent=11 // pred_fallthru
          _
      $region12: #{tpu_custom_call.1} parent=5 // pred_fallthru
        _
      %p147 = scmp.lt.s32.totalorder %s16, 4
      // Predicated region
      $region21: #{tpu_custom_call.1} parent=5 // pred_check
        %p148 = pneg %p147
      $region22: #{tpu_custom_call.1} parent=5 // pred_check_branch
        %150 = sbr.rel (%p148) target = $region24
      $region23: #{tpu_custom_call.1} parent=5 // pred_region
        // Predicated region
        $region25: #{tpu_custom_call.1} parent=23 // pred_check
          %p151 = pneg %p50
        $region26: #{tpu_custom_call.1} parent=23 // pred_check_branch
          %153 = sbr.rel (%p151) target = $region28
        $region27: #{tpu_custom_call.1} parent=23 // pred_region
          %s154 = sand.u32 %s40, 1
          %s155 = scalar_lea.sflag [#allocation4], %s154
          %s156 = sand.u32 %s40, 1
          %s157 = smul.addr %s156, 32
          %s158 = scalar_lea.vmem [#allocation3], %s157
          %s160 = ssub.s32 512, 512
          %161 = vsyncadd %s155, %s160
          %s162 = smul.addr %s23, 16
          %s163 = sadd.s32 %s24, %s162
          %s164 = smul.addr %s163, 64
          %s165 = scalar_lea.hbm %s0, %s164
          %s166 = sshll.u32 %s158, 4
          %s167 = int_to_ptr.vmem [resolvable:$true] %s166
          %172 = dma.hbm_to_vmem [thread:$0]  %s165, 512, %s167, %s155, 128, 64, 4
        $region28: #{tpu_custom_call.1} parent=23 // pred_fallthru
          _
      $region24: #{tpu_custom_call.1} parent=5 // pred_fallthru
        _
      %p173 = scmp.le.s32.totalorder 1, %s16
      %p174 = scmp.lt.s32.totalorder %s16, 5
      %p175 = pnand %p173, %p174
      %p176 = pneg %p175
      // Predicated region
      $region29: #{tpu_custom_call.1} parent=5 // pred_check
        _
      $region30: #{tpu_custom_call.1} parent=5 // pred_check_branch
        %178 = sbr.rel (%p175) target = $region32
      $region31: #{tpu_custom_call.1} parent=5 // pred_region
        %s179 = ssub.s32 %s16, 1
        %s180 = sand.u32 %s43, 1
        %s181 = scalar_lea.sflag [#allocation4], %s180
        %s182 = sand.u32 %s43, 1
        %s183 = smul.addr %s182, 32
        %s184 = scalar_lea.vmem [#allocation3], %s183
        // Predicated region
        $region33: #{tpu_custom_call.1} parent=31 // pred_check
          %p185 = pneg %p56
        $region34: #{tpu_custom_call.1} parent=31 // pred_check_branch
          %187 = sbr.rel (%p185) target = $region36
        $region35: #{tpu_custom_call.1} parent=31 // pred_region
          %188 = dma.done %s181, 512
        $region36: #{tpu_custom_call.1} parent=31 // pred_fallthru
          _
        %s189 = sand.u32 %s43, 1
        %s190 = scalar_lea.sflag [#allocation4], %s189
        %s191 = sand.u32 %s43, 1
        %s192 = smul.addr %s191, 32
        %s193 = scalar_lea.vmem [#allocation3], %s192
        %p194 = pneg %p56
        %p195 = pneg %p53
        %p196 = pneg %p77
        %p197 = pneg %p74
        %p198 = pneg %p98
        %p199 = pneg %p95
        %p200 = pneg %p126
        %p201 = pneg %p123
        %s202 = sand.u32 %s113, 1
        %s203 = scalar_lea.sflag [#allocation5], %s202
        %s204 = sand.u32 %s113, 1
        %s205 = smul.addr %s204, 96
        %s206 = scalar_lea.vmem [#allocation6], %s205
        %s208 = smul.u32 %s26, 128
        %s209 = sshra.s32 %s208, 7
        %s210 = sand.u32 %s208, 127
        %s211 = smul.u32 %s25, 32
        %s212 = sadd.s32 %s209, %s211
        %s213 = smul.addr %s212, 64
        %s214 = scalar_lea.hbm %s3, %s213
        %s216 = sshll.u32 %s206, 4
        %s217 = int_to_ptr.vmem [resolvable:$true] %s216
        %219 = dma.hbm_to_vmem [thread:$0]  %s214, 1024, %s217, [#allocation2], 128, 64, 4
        %v220 = vld [vmem:[%s2] sm:$0xff]
        %s221 = scalar_lea.vmem %s1, 8
        %v222 = vld [vmem:[%s221] sm:$0xf]
        %v223 = vld [vmem:[%s184] sm:$0x1]
        %v224 = vld [vmem:[%s184 + $0x8] sm:$0x1]
        %v225 = vld [vmem:[%s184 + $0x10] sm:$0x1]
        %v226 = vld [vmem:[%s184 + $0x18] sm:$0x1]
        %s227 = scalar_lea.vmem %s1, 12
        %v228 = vld [vmem:[%s227] sm:$0xf]
        %v233 = vunpack.c.l.b16 %v223
        %v234 = vunpack.c.l.b16 %v224
        %v235 = vunpack.c.l.b16 %v225
        %v236 = vunpack.c.l.b16 %v226
        %v237 = vpack.c.b16 %v233, %v233
        %v238 = vpack.c.b16 %v234, %v234
        %v239 = vpack.c.b16 %v235, %v235
        %v240 = vpack.c.b16 %v236, %v236
        %v241 = vunpack.c.l.b16 %v237
        %v242 = vunpack.c.l.b16 %v238
        %v243 = vunpack.c.l.b16 %v239
        %v244 = vunpack.c.l.b16 %v240
        %v245 = vrot.slane %v241, 1
        %vm246 = vcmask 1041409
        %v247 = vsel %vm246, %v242, %v245
        %v248 = vrot.slane %v243, 7
        %vm249 = vcmask 1042434
        %v250 = vsel %vm249, %v248, %v247
        %v251 = vrot.slane %v244, 6
        %vm252 = vcmask 1043459
        %v253 = vsel %vm252, %v251, %v250
        %v254 = vpack.c.b16 %v253, %v253
        %vm255 = vcmask 31744
        %v257 = vsel %vm255, %v228, 0
        %vm259 = vcmask 1041408
        %v261 = vsel %vm259, %v254, 0
        %263 = vmatprep.subr.bf16.mxu0 0
        %264 = vmatpush1.bf16.msra.mxu0 %v261
        %265 = vmatprep.subr.bf16.mxu0 0
        %266 = vmatpush1.bf16.msra.mxu0 0
        %267 = vmatprep.subr.bf16.mxu0 0
        %268 = vmatpush1.bf16.msra.mxu0 0
        %269 = vmatprep.subr.bf16.mxu0 0
        %270 = vmatpush1.bf16.msra.mxu0 0
        %271 = vmatprep.subr.bf16.mxu0 0
        %272 = vmatpush1.bf16.msra.mxu0 0
        %273 = vmatprep.subr.bf16.mxu0 0
        %274 = vmatpush1.bf16.msra.mxu0 0
        %275 = vmatprep.subr.bf16.mxu0 0
        %276 = vmatpush1.bf16.msra.mxu0 0
        %277 = vmatprep.subr.bf16.mxu0 0
        %278 = vmatpush1.bf16.msra.mxu0 0
        %279 = vmatprep.subr.bf16.mxu0 0
        %280 = vmatpush1.bf16.msra.mxu0 0
        %281 = vmatprep.subr.bf16.mxu0 0
        %282 = vmatpush1.bf16.msra.mxu0 0
        %283 = vmatprep.subr.bf16.mxu0 0
        %284 = vmatpush1.bf16.msra.mxu0 0
        %285 = vmatprep.subr.bf16.mxu0 0
        %286 = vmatpush1.bf16.msra.mxu0 0
        %287 = vmatprep.subr.bf16.mxu0 0
        %288 = vmatpush1.bf16.msra.mxu0 0
        %289 = vmatprep.subr.bf16.mxu0 0
        %290 = vmatpush1.bf16.msra.mxu0 0
        %291 = vmatprep.subr.bf16.mxu0 0
        %292 = vmatpush1.bf16.msra.mxu0 0
        %293 = vmatprep.subr.bf16.mxu0 0
        %294 = vmatpush1.bf16.msra.mxu0 0
        %295 = vmatprep.mubr.bf16.mxu0 0
        %296 = vmatmul.mubr.bf16.gmra.mrb[0].mxu0 %v257
        %v297 = vpop.f32.mrb[0].mxu0
        %v298 = vadd.f32 0.0, %v297
        %v299 = vpop.f32.mrb[0].mxu0
        %v300 = vpop.f32.mrb[0].mxu0
        %v301 = vpop.f32.mrb[0].mxu0
        %302 = vdwg.mxu0
        %v303 = vrot.slane %v242, 7
        %v304 = vsel %vm246, %v303, %v241
        %v305 = vrot.slane %v243, 6
        %v306 = vsel %vm249, %v305, %v304
        %v307 = vrot.slane %v244, 5
        %v308 = vsel %vm252, %v307, %v306
        %v309 = vpack.c.b16 %v308, %v308
        %v311 = vsel %vm255, %v222, 0
        %v314 = vsel %vm259, %v309, 0
        %316 = vmatprep.subr.bf16.mxu0 0
        %317 = vmatpush1.bf16.msra.mxu0 %v314
        %318 = vmatprep.subr.bf16.mxu0 0
        %319 = vmatpush1.bf16.msra.mxu0 0
        %320 = vmatprep.subr.bf16.mxu0 0
        %321 = vmatpush1.bf16.msra.mxu0 0
        %322 = vmatprep.subr.bf16.mxu0 0
        %323 = vmatpush1.bf16.msra.mxu0 0
        %324 = vmatprep.subr.bf16.mxu0 0
        %325 = vmatpush1.bf16.msra.mxu0 0
        %326 = vmatprep.subr.bf16.mxu0 0
        %327 = vmatpush1.bf16.msra.mxu0 0
        %328 = vmatprep.subr.bf16.mxu0 0
        %329 = vmatpush1.bf16.msra.mxu0 0
        %330 = vmatprep.subr.bf16.mxu0 0
        %331 = vmatpush1.bf16.msra.mxu0 0
        %332 = vmatprep.subr.bf16.mxu0 0
        %333 = vmatpush1.bf16.msra.mxu0 0
        %334 = vmatprep.subr.bf16.mxu0 0
        %335 = vmatpush1.bf16.msra.mxu0 0
        %336 = vmatprep.subr.bf16.mxu0 0
        %337 = vmatpush1.bf16.msra.mxu0 0
        %338 = vmatprep.subr.bf16.mxu0 0
        %339 = vmatpush1.bf16.msra.mxu0 0
        %340 = vmatprep.subr.bf16.mxu0 0
        %341 = vmatpush1.bf16.msra.mxu0 0
        %342 = vmatprep.subr.bf16.mxu0 0
        %343 = vmatpush1.bf16.msra.mxu0 0
        %344 = vmatprep.subr.bf16.mxu0 0
        %345 = vmatpush1.bf16.msra.mxu0 0
        %346 = vmatprep.subr.bf16.mxu0 0
        %347 = vmatpush1.bf16.msra.mxu0 0
        %348 = vmatprep.mubr.bf16.mxu0 0
        %349 = vmatmul.mubr.bf16.gmra.mrb[0].mxu0 %v311
        %v350 = vpop.f32.mrb[0].mxu0
        %v351 = vadd.f32 %v298, %v350
        %v352 = vpop.f32.mrb[0].mxu0
        %v353 = vpop.f32.mrb[0].mxu0
        %v354 = vpop.f32.mrb[0].mxu0
        %355 = vdwg.mxu0
        %s356 = scalar_lea.vmem %s1, 16
        %v357 = vld [vmem:[%s356] sm:$0xf]
        %v358 = vld [vmem:[%s184] sm:$0x2]
        %v359 = vld [vmem:[%s184 + $0x8] sm:$0x2]
        %v360 = vld [vmem:[%s184 + $0x10] sm:$0x2]
        %v361 = vld [vmem:[%s184 + $0x18] sm:$0x2]
        %v366 = vunpack.c.l.b16 %v358
        %v367 = vunpack.c.l.b16 %v359
        %v368 = vunpack.c.l.b16 %v360
        %v369 = vunpack.c.l.b16 %v361
        %v370 = vpack.c.b16 %v366, %v366
        %v371 = vpack.c.b16 %v367, %v367
        %v372 = vpack.c.b16 %v368, %v368
        %v373 = vpack.c.b16 %v369, %v369
        %v374 = vunpack.c.l.b16 %v370
        %v375 = vunpack.c.l.b16 %v371
        %v376 = vunpack.c.l.b16 %v372
        %v377 = vunpack.c.l.b16 %v373
        %v378 = vrot.slane %v374, 2
        %v379 = vrot.slane %v375, 1
        %v380 = vsel %vm246, %v379, %v378
        %v381 = vsel %vm249, %v376, %v380
        %v382 = vrot.slane %v377, 7
        %v383 = vsel %vm252, %v382, %v381
        %v384 = vpack.c.b16 %v383, %v383
        %v386 = vsel %vm255, %v357, 0
        %v389 = vsel %vm259, %v384, 0
        %391 = vmatprep.subr.bf16.mxu0 0
        %392 = vmatpush1.bf16.msra.mxu0 %v389
        %393 = vmatprep.subr.bf16.mxu0 0
        %394 = vmatpush1.bf16.msra.mxu0 0
        %395 = vmatprep.subr.bf16.mxu0 0
        %396 = vmatpush1.bf16.msra.mxu0 0
        %397 = vmatprep.subr.bf16.mxu0 0
        %398 = vmatpush1.bf16.msra.mxu0 0
        %399 = vmatprep.subr.bf16.mxu0 0
        %400 = vmatpush1.bf16.msra.mxu0 0
        %401 = vmatprep.subr.bf16.mxu0 0
        %402 = vmatpush1.bf16.msra.mxu0 0
        %403 = vmatprep.subr.bf16.mxu0 0
        %404 = vmatpush1.bf16.msra.mxu0 0
        %405 = vmatprep.subr.bf16.mxu0 0
        %406 = vmatpush1.bf16.msra.mxu0 0
        %407 = vmatprep.subr.bf16.mxu0 0
        %408 = vmatpush1.bf16.msra.mxu0 0
        %409 = vmatprep.subr.bf16.mxu0 0
        %410 = vmatpush1.bf16.msra.mxu0 0
        %411 = vmatprep.subr.bf16.mxu0 0
        %412 = vmatpush1.bf16.msra.mxu0 0
        %413 = vmatprep.subr.bf16.mxu0 0
        %414 = vmatpush1.bf16.msra.mxu0 0
        %415 = vmatprep.subr.bf16.mxu0 0
        %416 = vmatpush1.bf16.msra.mxu0 0
        %417 = vmatprep.subr.bf16.mxu0 0
        %418 = vmatpush1.bf16.msra.mxu0 0
        %419 = vmatprep.subr.bf16.mxu0 0
        %420 = vmatpush1.bf16.msra.mxu0 0
        %421 = vmatprep.subr.bf16.mxu0 0
        %422 = vmatpush1.bf16.msra.mxu0 0
        %423 = vmatprep.mubr.bf16.mxu0 0
        %424 = vmatmul.mubr.bf16.gmra.mrb[0].mxu0 %v386
        %v425 = vpop.f32.mrb[0].mxu0
        %v426 = vadd.f32 0.0, %v425
        %v427 = vpop.f32.mrb[0].mxu0
        %v428 = vpop.f32.mrb[0].mxu0
        %v429 = vpop.f32.mrb[0].mxu0
        %430 = vdwg.mxu0
        %v431 = vadd.f32 %v351, %v426
        %433 = vset.pattern.permute.xlu0 0
        %434 = vperm.xlu0 %433, %v220
        %v435 = vpop.permute.xlu0 %434
        %v437 = vadd.f32 %v431, %v435
        %v438 = vmax.f32 %v437, 0.0
        %v440 = vcombine.high %v438, %v438
        %v442 = vunpack.c.l.s4 1966171168
        %v443 = vunpack.c.0.s8 %v442
        %v444 = vlaneseq
        %v445 = vshrl.u32 %v444, 7
        %v446 = vsub.s32 %v443, %v445
        %v447 = vrot.slane %v438, %v446
        %v449 = vunpack.c.l.s4 1966171168
        %v450 = vunpack.c.0.s8 %v449
        %v451 = vlaneseq
        %v452 = vshrl.u32 %v451, 7
        %v453 = vsub.s32 %v450, %v452
        %v454 = vrot.slane %v440, %v453
        %v455 = vcombine.high %v447, %v447
        %v456 = vcombine.high %v454, %v454
        %v458 = vunpack.c.l.s4 1966171168
        %v459 = vunpack.c.0.s8 %v458
        %v460 = vlaneseq
        %v461 = vshrl.u32 %v460, 7
        %v462 = vsub.s32 %v459, %v461
        %v463 = vrot.slane %v447, %v462
        %v465 = vunpack.c.l.s4 1966171168
        %v466 = vunpack.c.0.s8 %v465
        %v467 = vlaneseq
        %v468 = vshrl.u32 %v467, 7
        %v469 = vsub.s32 %v466, %v468
        %v470 = vrot.slane %v454, %v469
        %v472 = vunpack.c.l.s4 1966171168
        %v473 = vunpack.c.0.s8 %v472
        %v474 = vlaneseq
        %v475 = vshrl.u32 %v474, 7
        %v476 = vsub.s32 %v473, %v475
        %v477 = vrot.slane %v455, %v476
        %v479 = vunpack.c.l.s4 1966171168
        %v480 = vunpack.c.0.s8 %v479
        %v481 = vlaneseq
        %v482 = vshrl.u32 %v481, 7
        %v483 = vsub.s32 %v480, %v482
        %v484 = vrot.slane %v456, %v483
        %v485 = vcombine.high %v463, %v463
        %v486 = vcombine.high %v470, %v470
        %v487 = vcombine.high %v477, %v477
        %v488 = vcombine.high %v484, %v484
        %s497 = scalar_lea.vmem %s206, 64 [#allocation6]
        %498 = vst [vmem:[%s497] sm:$0x1] %v463
        %499 = vst [vmem:[%s497 + $0x4] sm:$0x1] %v477
        %500 = vst [vmem:[%s497 + $0x8] sm:$0x1] %v485
        %501 = vst [vmem:[%s497 + $0xc] sm:$0x1] %v487
        %502 = vst [vmem:[%s497 + $0x10] sm:$0x1] %v470
        %503 = vst [vmem:[%s497 + $0x14] sm:$0x1] %v484
        %504 = vst [vmem:[%s497 + $0x18] sm:$0x1] %v486
        %505 = vst [vmem:[%s497 + $0x1c] sm:$0x1] %v488
        %v506 = vld [vmem:[%s1] sm:$0xf]
        %v507 = vld [vmem:[%s184] sm:$0x2]
        %v508 = vld [vmem:[%s184 + $0x8] sm:$0x2]
        %v509 = vld [vmem:[%s184 + $0x10] sm:$0x2]
        %v510 = vld [vmem:[%s184 + $0x18] sm:$0x2]
        %s511 = scalar_lea.vmem %s1, 4
        %v512 = vld [vmem:[%s511] sm:$0xf]
        %v517 = vunpack.c.l.b16 %v507
        %v518 = vunpack.c.l.b16 %v508
        %v519 = vunpack.c.l.b16 %v509
        %v520 = vunpack.c.l.b16 %v510
        %v521 = vpack.c.b16 %v517, %v517
        %v522 = vpack.c.b16 %v518, %v518
        %v523 = vpack.c.b16 %v519, %v519
        %v524 = vpack.c.b16 %v520, %v520
        %v525 = vunpack.c.l.b16 %v521
        %v526 = vunpack.c.l.b16 %v522
        %v527 = vunpack.c.l.b16 %v523
        %v528 = vunpack.c.l.b16 %v524
        %v529 = vrot.slane %v525, 3
        %v530 = vrot.slane %v526, 2
        %v531 = vsel %vm246, %v530, %v529
        %v532 = vrot.slane %v527, 1
        %v533 = vsel %vm249, %v532, %v531
        %v534 = vsel %vm252, %v528, %v533
        %v535 = vpack.c.b16 %v534, %v534
        %v537 = vsel %vm255, %v512, 0
        %v540 = vsel %vm259, %v535, 0
        %542 = vmatprep.subr.bf16.mxu0 0
        %543 = vmatpush1.bf16.msra.mxu0 %v540
        %544 = vmatprep.subr.bf16.mxu0 0
        %545 = vmatpush1.bf16.msra.mxu0 0
        %546 = vmatprep.subr.bf16.mxu0 0
        %547 = vmatpush1.bf16.msra.mxu0 0
        %548 = vmatprep.subr.bf16.mxu0 0
        %549 = vmatpush1.bf16.msra.mxu0 0
        %550 = vmatprep.subr.bf16.mxu0 0
        %551 = vmatpush1.bf16.msra.mxu0 0
        %552 = vmatprep.subr.bf16.mxu0 0
        %553 = vmatpush1.bf16.msra.mxu0 0
        %554 = vmatprep.subr.bf16.mxu0 0
        %555 = vmatpush1.bf16.msra.mxu0 0
        %556 = vmatprep.subr.bf16.mxu0 0
        %557 = vmatpush1.bf16.msra.mxu0 0
        %558 = vmatprep.subr.bf16.mxu0 0
        %559 = vmatpush1.bf16.msra.mxu0 0
        %560 = vmatprep.subr.bf16.mxu0 0
        %561 = vmatpush1.bf16.msra.mxu0 0
        %562 = vmatprep.subr.bf16.mxu0 0
        %563 = vmatpush1.bf16.msra.mxu0 0
        %564 = vmatprep.subr.bf16.mxu0 0
        %565 = vmatpush1.bf16.msra.mxu0 0
        %566 = vmatprep.subr.bf16.mxu0 0
        %567 = vmatpush1.bf16.msra.mxu0 0
        %568 = vmatprep.subr.bf16.mxu0 0
        %569 = vmatpush1.bf16.msra.mxu0 0
        %570 = vmatprep.subr.bf16.mxu0 0
        %571 = vmatpush1.bf16.msra.mxu0 0
        %572 = vmatprep.subr.bf16.mxu0 0
        %573 = vmatpush1.bf16.msra.mxu0 0
        %574 = vmatprep.mubr.bf16.mxu0 0
        %575 = vmatmul.mubr.bf16.gmra.mrb[0].mxu0 %v537
        %v576 = vpop.f32.mrb[0].mxu0
        %v577 = vadd.f32 0.0, %v576
        %v578 = vpop.f32.mrb[0].mxu0
        %v579 = vpop.f32.mrb[0].mxu0
        %v580 = vpop.f32.mrb[0].mxu0
        %581 = vdwg.mxu0
        %v582 = vrot.slane %v525, 2
        %v583 = vrot.slane %v526, 1
        %v584 = vsel %vm246, %v583, %v582
        %v585 = vsel %vm249, %v527, %v584
        %v586 = vrot.slane %v528, 7
        %v587 = vsel %vm252, %v586, %v585
        %v588 = vpack.c.b16 %v587, %v587
        %v590 = vsel %vm255, %v506, 0
        %v593 = vsel %vm259, %v588, 0
        %595 = vmatprep.subr.bf16.mxu0 0
        %596 = vmatpush1.bf16.msra.mxu0 %v593
        %597 = vmatprep.subr.bf16.mxu0 0
        %598 = vmatpush1.bf16.msra.mxu0 0
        %599 = vmatprep.subr.bf16.mxu0 0
        %600 = vmatpush1.bf16.msra.mxu0 0
        %601 = vmatprep.subr.bf16.mxu0 0
        %602 = vmatpush1.bf16.msra.mxu0 0
        %603 = vmatprep.subr.bf16.mxu0 0
        %604 = vmatpush1.bf16.msra.mxu0 0
        %605 = vmatprep.subr.bf16.mxu0 0
        %606 = vmatpush1.bf16.msra.mxu0 0
        %607 = vmatprep.subr.bf16.mxu0 0
        %608 = vmatpush1.bf16.msra.mxu0 0
        %609 = vmatprep.subr.bf16.mxu0 0
        %610 = vmatpush1.bf16.msra.mxu0 0
        %611 = vmatprep.subr.bf16.mxu0 0
        %612 = vmatpush1.bf16.msra.mxu0 0
        %613 = vmatprep.subr.bf16.mxu0 0
        %614 = vmatpush1.bf16.msra.mxu0 0
        %615 = vmatprep.subr.bf16.mxu0 0
        %616 = vmatpush1.bf16.msra.mxu0 0
        %617 = vmatprep.subr.bf16.mxu0 0
        %618 = vmatpush1.bf16.msra.mxu0 0
        %619 = vmatprep.subr.bf16.mxu0 0
        %620 = vmatpush1.bf16.msra.mxu0 0
        %621 = vmatprep.subr.bf16.mxu0 0
        %622 = vmatpush1.bf16.msra.mxu0 0
        %623 = vmatprep.subr.bf16.mxu0 0
        %624 = vmatpush1.bf16.msra.mxu0 0
        %625 = vmatprep.subr.bf16.mxu0 0
        %626 = vmatpush1.bf16.msra.mxu0 0
        %627 = vmatprep.mubr.bf16.mxu0 0
        %628 = vmatmul.mubr.bf16.gmra.mrb[0].mxu0 %v590
        %v629 = vpop.f32.mrb[0].mxu0
        %v630 = vadd.f32 %v577, %v629
        %v631 = vpop.f32.mrb[0].mxu0
        %v632 = vpop.f32.mrb[0].mxu0
        %v633 = vpop.f32.mrb[0].mxu0
        %634 = vdwg.mxu0
        %v635 = vld [vmem:[%s221] sm:$0xf]
        %v636 = vld [vmem:[%s184] sm:$0x4]
        %v637 = vld [vmem:[%s184 + $0x8] sm:$0x4]
        %v638 = vld [vmem:[%s184 + $0x10] sm:$0x4]
        %v639 = vld [vmem:[%s184 + $0x18] sm:$0x4]
        %v644 = vunpack.c.l.b16 %v636
        %v645 = vunpack.c.l.b16 %v637
        %v646 = vunpack.c.l.b16 %v638
        %v647 = vunpack.c.l.b16 %v639
        %v648 = vpack.c.b16 %v644, %v644
        %v649 = vpack.c.b16 %v645, %v645
        %v650 = vpack.c.b16 %v646, %v646
        %v651 = vpack.c.b16 %v647, %v647
        %v652 = vunpack.c.l.b16 %v648
        %v653 = vunpack.c.l.b16 %v649
        %v654 = vunpack.c.l.b16 %v650
        %v655 = vunpack.c.l.b16 %v651
        %v656 = vrot.slane %v652, 4
        %v657 = vrot.slane %v653, 3
        %v658 = vsel %vm246, %v657, %v656
        %v659 = vrot.slane %v654, 2
        %v660 = vsel %vm249, %v659, %v658
        %v661 = vrot.slane %v655, 1
        %v662 = vsel %vm252, %v661, %v660
        %v663 = vpack.c.b16 %v662, %v662
        %v665 = vsel %vm255, %v635, 0
        %v668 = vsel %vm259, %v663, 0
        %670 = vmatprep.subr.bf16.mxu0 0
        %671 = vmatpush1.bf16.msra.mxu0 %v668
        %672 = vmatprep.subr.bf16.mxu0 0
        %673 = vmatpush1.bf16.msra.mxu0 0
        %674 = vmatprep.subr.bf16.mxu0 0
        %675 = vmatpush1.bf16.msra.mxu0 0
        %676 = vmatprep.subr.bf16.mxu0 0
        %677 = vmatpush1.bf16.msra.mxu0 0
        %678 = vmatprep.subr.bf16.mxu0 0
        %679 = vmatpush1.bf16.msra.mxu0 0
        %680 = vmatprep.subr.bf16.mxu0 0
        %681 = vmatpush1.bf16.msra.mxu0 0
        %682 = vmatprep.subr.bf16.mxu0 0
        %683 = vmatpush1.bf16.msra.mxu0 0
        %684 = vmatprep.subr.bf16.mxu0 0
        %685 = vmatpush1.bf16.msra.mxu0 0
        %686 = vmatprep.subr.bf16.mxu0 0
        %687 = vmatpush1.bf16.msra.mxu0 0
        %688 = vmatprep.subr.bf16.mxu0 0
        %689 = vmatpush1.bf16.msra.mxu0 0
        %690 = vmatprep.subr.bf16.mxu0 0
        %691 = vmatpush1.bf16.msra.mxu0 0
        %692 = vmatprep.subr.bf16.mxu0 0
        %693 = vmatpush1.bf16.msra.mxu0 0
        %694 = vmatprep.subr.bf16.mxu0 0
        %695 = vmatpush1.bf16.msra.mxu0 0
        %696 = vmatprep.subr.bf16.mxu0 0
        %697 = vmatpush1.bf16.msra.mxu0 0
        %698 = vmatprep.subr.bf16.mxu0 0
        %699 = vmatpush1.bf16.msra.mxu0 0
        %700 = vmatprep.subr.bf16.mxu0 0
        %701 = vmatpush1.bf16.msra.mxu0 0
        %702 = vmatprep.mubr.bf16.mxu0 0
        %703 = vmatmul.mubr.bf16.gmra.mrb[0].mxu0 %v665
        %v704 = vpop.f32.mrb[0].mxu0
        %v705 = vadd.f32 0.0, %v704
        %v706 = vpop.f32.mrb[0].mxu0
        %v707 = vpop.f32.mrb[0].mxu0
        %v708 = vpop.f32.mrb[0].mxu0
        %709 = vdwg.mxu0
        %v710 = vadd.f32 %v630, %v705
        %v711 = vld [vmem:[%s227] sm:$0xf]
        %v712 = vrot.slane %v652, 5
        %v713 = vrot.slane %v653, 4
        %v714 = vsel %vm246, %v713, %v712
        %v715 = vrot.slane %v654, 3
        %v716 = vsel %vm249, %v715, %v714
        %v717 = vrot.slane %v655, 2
        %v718 = vsel %vm252, %v717, %v716
        %v719 = vpack.c.b16 %v718, %v718
        %v721 = vsel %vm255, %v711, 0
        %v724 = vsel %vm259, %v719, 0
        %726 = vmatprep.subr.bf16.mxu0 0
        %727 = vmatpush1.bf16.msra.mxu0 %v724
        %728 = vmatprep.subr.bf16.mxu0 0
        %729 = vmatpush1.bf16.msra.mxu0 0
        %730 = vmatprep.subr.bf16.mxu0 0
        %731 = vmatpush1.bf16.msra.mxu0 0
        %732 = vmatprep.subr.bf16.mxu0 0
        %733 = vmatpush1.bf16.msra.mxu0 0
        %734 = vmatprep.subr.bf16.mxu0 0
        %735 = vmatpush1.bf16.msra.mxu0 0
        %736 = vmatprep.subr.bf16.mxu0 0
        %737 = vmatpush1.bf16.msra.mxu0 0
        %738 = vmatprep.subr.bf16.mxu0 0
        %739 = vmatpush1.bf16.msra.mxu0 0
        %740 = vmatprep.subr.bf16.mxu0 0
        %741 = vmatpush1.bf16.msra.mxu0 0
        %742 = vmatprep.subr.bf16.mxu0 0
        %743 = vmatpush1.bf16.msra.mxu0 0
        %744 = vmatprep.subr.bf16.mxu0 0
        %745 = vmatpush1.bf16.msra.mxu0 0
        %746 = vmatprep.subr.bf16.mxu0 0
        %747 = vmatpush1.bf16.msra.mxu0 0
        %748 = vmatprep.subr.bf16.mxu0 0
        %749 = vmatpush1.bf16.msra.mxu0 0
        %750 = vmatprep.subr.bf16.mxu0 0
        %751 = vmatpush1.bf16.msra.mxu0 0
        %752 = vmatprep.subr.bf16.mxu0 0
        %753 = vmatpush1.bf16.msra.mxu0 0
        %754 = vmatprep.subr.bf16.mxu0 0
        %755 = vmatpush1.bf16.msra.mxu0 0
        %756 = vmatprep.subr.bf16.mxu0 0
        %757 = vmatpush1.bf16.msra.mxu0 0
        %758 = vmatprep.mubr.bf16.mxu0 0
        %759 = vmatmul.mubr.bf16.gmra.mrb[0].mxu0 %v721
        %v760 = vpop.f32.mrb[0].mxu0
        %v761 = vadd.f32 0.0, %v760
        %v762 = vpop.f32.mrb[0].mxu0
        %v763 = vpop.f32.mrb[0].mxu0
        %v764 = vpop.f32.mrb[0].mxu0
        %765 = vdwg.mxu0
        %v766 = vadd.f32 %v710, %v761
        %v767 = vld [vmem:[%s356] sm:$0xf]
        %v768 = vld [vmem:[%s184] sm:$0x8]
        %v769 = vld [vmem:[%s184 + $0x8] sm:$0x8]
        %v770 = vld [vmem:[%s184 + $0x10] sm:$0x8]
        %v771 = vld [vmem:[%s184 + $0x18] sm:$0x8]
        %v776 = vunpack.c.l.b16 %v768
        %v777 = vunpack.c.l.b16 %v769
        %v778 = vunpack.c.l.b16 %v770
        %v779 = vunpack.c.l.b16 %v771
        %v780 = vpack.c.b16 %v776, %v776
        %v781 = vpack.c.b16 %v777, %v777
        %v782 = vpack.c.b16 %v778, %v778
        %v783 = vpack.c.b16 %v779, %v779
        %v784 = vunpack.c.l.b16 %v780
        %v785 = vunpack.c.l.b16 %v781
        %v786 = vunpack.c.l.b16 %v782
        %v787 = vunpack.c.l.b16 %v783
        %v788 = vrot.slane %v784, 6
        %v789 = vrot.slane %v785, 5
        %v790 = vsel %vm246, %v789, %v788
        %v791 = vrot.slane %v786, 4
        %v792 = vsel %vm249, %v791, %v790
        %v793 = vrot.slane %v787, 3
        %v794 = vsel %vm252, %v793, %v792
        %v795 = vpack.c.b16 %v794, %v794
        %v797 = vsel %vm255, %v767, 0
        %v800 = vsel %vm259, %v795, 0
        %802 = vmatprep.subr.bf16.mxu0 0
        %803 = vmatpush1.bf16.msra.mxu0 %v800
        %804 = vmatprep.subr.bf16.mxu0 0
        %805 = vmatpush1.bf16.msra.mxu0 0
        %806 = vmatprep.subr.bf16.mxu0 0
        %807 = vmatpush1.bf16.msra.mxu0 0
        %808 = vmatprep.subr.bf16.mxu0 0
        %809 = vmatpush1.bf16.msra.mxu0 0
        %810 = vmatprep.subr.bf16.mxu0 0
        %811 = vmatpush1.bf16.msra.mxu0 0
        %812 = vmatprep.subr.bf16.mxu0 0
        %813 = vmatpush1.bf16.msra.mxu0 0
        %814 = vmatprep.subr.bf16.mxu0 0
        %815 = vmatpush1.bf16.msra.mxu0 0
        %816 = vmatprep.subr.bf16.mxu0 0
        %817 = vmatpush1.bf16.msra.mxu0 0
        %818 = vmatprep.subr.bf16.mxu0 0
        %819 = vmatpush1.bf16.msra.mxu0 0
        %820 = vmatprep.subr.bf16.mxu0 0
        %821 = vmatpush1.bf16.msra.mxu0 0
        %822 = vmatprep.subr.bf16.mxu0 0
        %823 = vmatpush1.bf16.msra.mxu0 0
        %824 = vmatprep.subr.bf16.mxu0 0
        %825 = vmatpush1.bf16.msra.mxu0 0
        %826 = vmatprep.subr.bf16.mxu0 0
        %827 = vmatpush1.bf16.msra.mxu0 0
        %828 = vmatprep.subr.bf16.mxu0 0
        %829 = vmatpush1.bf16.msra.mxu0 0
        %830 = vmatprep.subr.bf16.mxu0 0
        %831 = vmatpush1.bf16.msra.mxu0 0
        %832 = vmatprep.subr.bf16.mxu0 0
        %833 = vmatpush1.bf16.msra.mxu0 0
        %834 = vmatprep.mubr.bf16.mxu0 0
        %835 = vmatmul.mubr.bf16.gmra.mrb[0].mxu0 %v797
        %v836 = vpop.f32.mrb[0].mxu0
        %v837 = vadd.f32 0.0, %v836
        %v838 = vpop.f32.mrb[0].mxu0
        %v839 = vpop.f32.mrb[0].mxu0
        %v840 = vpop.f32.mrb[0].mxu0
        %841 = vdwg.mxu0
        %v842 = vadd.f32 %v766, %v837
        %v843 = vadd.f32 %v842, %v435
        %v844 = vmax.f32 %v843, 0.0
        %v846 = vcombine.high %v844, %v844
        %v848 = vunpack.c.l.s4 1966171168
        %v849 = vunpack.c.0.s8 %v848
        %v850 = vlaneseq
        %v851 = vshrl.u32 %v850, 7
        %v852 = vsub.s32 %v849, %v851
        %v853 = vrot.slane %v844, %v852
        %v855 = vunpack.c.l.s4 1966171168
        %v856 = vunpack.c.0.s8 %v855
        %v857 = vlaneseq
        %v858 = vshrl.u32 %v857, 7
        %v859 = vsub.s32 %v856, %v858
        %v860 = vrot.slane %v846, %v859
        %v861 = vcombine.high %v853, %v853
        %v862 = vcombine.high %v860, %v860
        %v864 = vunpack.c.l.s4 1966171168
        %v865 = vunpack.c.0.s8 %v864
        %v866 = vlaneseq
        %v867 = vshrl.u32 %v866, 7
        %v868 = vsub.s32 %v865, %v867
        %v869 = vrot.slane %v853, %v868
        %v871 = vunpack.c.l.s4 1966171168
        %v872 = vunpack.c.0.s8 %v871
        %v873 = vlaneseq
        %v874 = vshrl.u32 %v873, 7
        %v875 = vsub.s32 %v872, %v874
        %v876 = vrot.slane %v860, %v875
        %v878 = vunpack.c.l.s4 1966171168
        %v879 = vunpack.c.0.s8 %v878
        %v880 = vlaneseq
        %v881 = vshrl.u32 %v880, 7
        %v882 = vsub.s32 %v879, %v881
        %v883 = vrot.slane %v861, %v882
        %v885 = vunpack.c.l.s4 1966171168
        %v886 = vunpack.c.0.s8 %v885
        %v887 = vlaneseq
        %v888 = vshrl.u32 %v887, 7
        %v889 = vsub.s32 %v886, %v888
        %v890 = vrot.slane %v862, %v889
        %v891 = vcombine.high %v869, %v869
        %v892 = vcombine.high %v876, %v876
        %v893 = vcombine.high %v883, %v883
        %v894 = vcombine.high %v890, %v890
        %903 = vst [vmem:[%s497 + $0x1] sm:$0x1] %v869
        %904 = vst [vmem:[%s497 + $0x5] sm:$0x1] %v883
        %905 = vst [vmem:[%s497 + $0x9] sm:$0x1] %v891
        %906 = vst [vmem:[%s497 + $0xd] sm:$0x1] %v893
        %907 = vst [vmem:[%s497 + $0x11] sm:$0x1] %v876
        %908 = vst [vmem:[%s497 + $0x15] sm:$0x1] %v890
        %909 = vst [vmem:[%s497 + $0x19] sm:$0x1] %v892
        %910 = vst [vmem:[%s497 + $0x1d] sm:$0x1] %v894
        %v911 = vld [vmem:[%s1] sm:$0xf]
        %v912 = vld [vmem:[%s184] sm:$0x8]
        %v913 = vld [vmem:[%s184 + $0x8] sm:$0x8]
        %v914 = vld [vmem:[%s184 + $0x10] sm:$0x8]
        %v915 = vld [vmem:[%s184 + $0x18] sm:$0x8]
        %v916 = vld [vmem:[%s511] sm:$0xf]
        %v921 = vunpack.c.l.b16 %v912
        %v922 = vunpack.c.l.b16 %v913
        %v923 = vunpack.c.l.b16 %v914
        %v924 = vunpack.c.l.b16 %v915
        %v925 = vpack.c.b16 %v921, %v921
        %v926 = vpack.c.b16 %v922, %v922
        %v927 = vpack.c.b16 %v923, %v923
        %v928 = vpack.c.b16 %v924, %v924
        %v929 = vunpack.c.l.b16 %v925
        %v930 = vunpack.c.l.b16 %v926
        %v931 = vunpack.c.l.b16 %v927
        %v932 = vunpack.c.l.b16 %v928
        %v933 = vrot.slane %v929, 7
        %v934 = vrot.slane %v930, 6
        %v935 = vsel %vm246, %v934, %v933
        %v936 = vrot.slane %v931, 5
        %v937 = vsel %vm249, %v936, %v935
        %v938 = vrot.slane %v932, 4
        %v939 = vsel %vm252, %v938, %v937
        %v940 = vpack.c.b16 %v939, %v939
        %v942 = vsel %vm255, %v916, 0
        %v945 = vsel %vm259, %v940, 0
        %947 = vmatprep.subr.bf16.mxu0 0
        %948 = vmatpush1.bf16.msra.mxu0 %v945
        %949 = vmatprep.subr.bf16.mxu0 0
        %950 = vmatpush1.bf16.msra.mxu0 0
        %951 = vmatprep.subr.bf16.mxu0 0
        %952 = vmatpush1.bf16.msra.mxu0 0
        %953 = vmatprep.subr.bf16.mxu0 0
        %954 = vmatpush1.bf16.msra.mxu0 0
        %955 = vmatprep.subr.bf16.mxu0 0
        %956 = vmatpush1.bf16.msra.mxu0 0
        %957 = vmatprep.subr.bf16.mxu0 0
        %958 = vmatpush1.bf16.msra.mxu0 0
        %959 = vmatprep.subr.bf16.mxu0 0
        %960 = vmatpush1.bf16.msra.mxu0 0
        %961 = vmatprep.subr.bf16.mxu0 0
        %962 = vmatpush1.bf16.msra.mxu0 0
        %963 = vmatprep.subr.bf16.mxu0 0
        %964 = vmatpush1.bf16.msra.mxu0 0
        %965 = vmatprep.subr.bf16.mxu0 0
        %966 = vmatpush1.bf16.msra.mxu0 0
        %967 = vmatprep.subr.bf16.mxu0 0
        %968 = vmatpush1.bf16.msra.mxu0 0
        %969 = vmatprep.subr.bf16.mxu0 0
        %970 = vmatpush1.bf16.msra.mxu0 0
        %971 = vmatprep.subr.bf16.mxu0 0
        %972 = vmatpush1.bf16.msra.mxu0 0
        %973 = vmatprep.subr.bf16.mxu0 0
        %974 = vmatpush1.bf16.msra.mxu0 0
        %975 = vmatprep.subr.bf16.mxu0 0
        %976 = vmatpush1.bf16.msra.mxu0 0
        %977 = vmatprep.subr.bf16.mxu0 0
        %978 = vmatpush1.bf16.msra.mxu0 0
        %979 = vmatprep.mubr.bf16.mxu0 0
        %980 = vmatmul.mubr.bf16.gmra.mrb[0].mxu0 %v942
        %v981 = vpop.f32.mrb[0].mxu0
        %v982 = vadd.f32 0.0, %v981
        %v983 = vpop.f32.mrb[0].mxu0
        %v984 = vpop.f32.mrb[0].mxu0
        %v985 = vpop.f32.mrb[0].mxu0
        %986 = vdwg.mxu0
        %v987 = vrot.slane %v929, 6
        %v988 = vrot.slane %v930, 5
        %v989 = vsel %vm246, %v988, %v987
        %v990 = vrot.slane %v931, 4
        %v991 = vsel %vm249, %v990, %v989
        %v992 = vrot.slane %v932, 3
        %v993 = vsel %vm252, %v992, %v991
        %v994 = vpack.c.b16 %v993, %v993
        %v996 = vsel %vm255, %v911, 0
        %v999 = vsel %vm259, %v994, 0
        %1001 = vmatprep.subr.bf16.mxu0 0
        %1002 = vmatpush1.bf16.msra.mxu0 %v999
        %1003 = vmatprep.subr.bf16.mxu0 0
        %1004 = vmatpush1.bf16.msra.mxu0 0
        %1005 = vmatprep.subr.bf16.mxu0 0
        %1006 = vmatpush1.bf16.msra.mxu0 0
        %1007 = vmatprep.subr.bf16.mxu0 0
        %1008 = vmatpush1.bf16.msra.mxu0 0
        %1009 = vmatprep.subr.bf16.mxu0 0
        %1010 = vmatpush1.bf16.msra.mxu0 0
        %1011 = vmatprep.subr.bf16.mxu0 0
        %1012 = vmatpush1.bf16.msra.mxu0 0
        %1013 = vmatprep.subr.bf16.mxu0 0
        %1014 = vmatpush1.bf16.msra.mxu0 0
        %1015 = vmatprep.subr.bf16.mxu0 0
        %1016 = vmatpush1.bf16.msra.mxu0 0
        %1017 = vmatprep.subr.bf16.mxu0 0
        %1018 = vmatpush1.bf16.msra.mxu0 0
        %1019 = vmatprep.subr.bf16.mxu0 0
        %1020 = vmatpush1.bf16.msra.mxu0 0
        %1021 = vmatprep.subr.bf16.mxu0 0
        %1022 = vmatpush1.bf16.msra.mxu0 0
        %1023 = vmatprep.subr.bf16.mxu0 0
        %1024 = vmatpush1.bf16.msra.mxu0 0
        %1025 = vmatprep.subr.bf16.mxu0 0
        %1026 = vmatpush1.bf16.msra.mxu0 0
        %1027 = vmatprep.subr.bf16.mxu0 0
        %1028 = vmatpush1.bf16.msra.mxu0 0
        %1029 = vmatprep.subr.bf16.mxu0 0
        %1030 = vmatpush1.bf16.msra.mxu0 0
        %1031 = vmatprep.subr.bf16.mxu0 0
        %1032 = vmatpush1.bf16.msra.mxu0 0
        %1033 = vmatprep.mubr.bf16.mxu0 0
        %1034 = vmatmul.mubr.bf16.gmra.mrb[0].mxu0 %v996
        %v1035 = vpop.f32.mrb[0].mxu0
        %v1036 = vadd.f32 %v982, %v1035
        %v1037 = vpop.f32.mrb[0].mxu0
        %v1038 = vpop.f32.mrb[0].mxu0
        %v1039 = vpop.f32.mrb[0].mxu0
        %1040 = vdwg.mxu0
        %v1041 = vld [vmem:[%s221] sm:$0xf]
        %v1042 = vld [vmem:[%s184 + $0x4] sm:$0x1]
        %v1043 = vld [vmem:[%s184 + $0xc] sm:$0x1]
        %v1044 = vld [vmem:[%s184 + $0x14] sm:$0x1]
        %v1045 = vld [vmem:[%s184 + $0x1c] sm:$0x1]
        %v1050 = vunpack.c.l.b16 %v1042
        %v1051 = vunpack.c.l.b16 %v1043
        %v1052 = vunpack.c.l.b16 %v1044
        %v1053 = vunpack.c.l.b16 %v1045
        %v1054 = vpack.c.b16 %v1050, %v1050
        %v1055 = vpack.c.b16 %v1051, %v1051
        %v1056 = vpack.c.b16 %v1052, %v1052
        %v1057 = vpack.c.b16 %v1053, %v1053
        %v1058 = vunpack.c.l.b16 %v1054
        %v1059 = vunpack.c.l.b16 %v1055
        %v1060 = vunpack.c.l.b16 %v1056
        %v1061 = vunpack.c.l.b16 %v1057
        %v1062 = vrot.slane %v1059, 7
        %v1063 = vsel %vm246, %v1062, %v1058
        %v1064 = vrot.slane %v1060, 6
        %v1065 = vsel %vm249, %v1064, %v1063
        %v1066 = vrot.slane %v1061, 5
        %v1067 = vsel %vm252, %v1066, %v1065
        %v1068 = vpack.c.b16 %v1067, %v1067
        %v1070 = vsel %vm255, %v1041, 0
        %v1073 = vsel %vm259, %v1068, 0
        %1075 = vmatprep.subr.bf16.mxu0 0
        %1076 = vmatpush1.bf16.msra.mxu0 %v1073
        %1077 = vmatprep.subr.bf16.mxu0 0
        %1078 = vmatpush1.bf16.msra.mxu0 0
        %1079 = vmatprep.subr.bf16.mxu0 0
        %1080 = vmatpush1.bf16.msra.mxu0 0
        %1081 = vmatprep.subr.bf16.mxu0 0
        %1082 = vmatpush1.bf16.msra.mxu0 0
        %1083 = vmatprep.subr.bf16.mxu0 0
        %1084 = vmatpush1.bf16.msra.mxu0 0
        %1085 = vmatprep.subr.bf16.mxu0 0
        %1086 = vmatpush1.bf16.msra.mxu0 0
        %1087 = vmatprep.subr.bf16.mxu0 0
        %1088 = vmatpush1.bf16.msra.mxu0 0
        %1089 = vmatprep.subr.bf16.mxu0 0
        %1090 = vmatpush1.bf16.msra.mxu0 0
        %1091 = vmatprep.subr.bf16.mxu0 0
        %1092 = vmatpush1.bf16.msra.mxu0 0
        %1093 = vmatprep.subr.bf16.mxu0 0
        %1094 = vmatpush1.bf16.msra.mxu0 0
        %1095 = vmatprep.subr.bf16.mxu0 0
        %1096 = vmatpush1.bf16.msra.mxu0 0
        %1097 = vmatprep.subr.bf16.mxu0 0
        %1098 = vmatpush1.bf16.msra.mxu0 0
        %1099 = vmatprep.subr.bf16.mxu0 0
        %1100 = vmatpush1.bf16.msra.mxu0 0
        %1101 = vmatprep.subr.bf16.mxu0 0
        %1102 = vmatpush1.bf16.msra.mxu0 0
        %1103 = vmatprep.subr.bf16.mxu0 0
        %1104 = vmatpush1.bf16.msra.mxu0 0
        %1105 = vmatprep.subr.bf16.mxu0 0
        %1106 = vmatpush1.bf16.msra.mxu0 0
        %1107 = vmatprep.mubr.bf16.mxu0 0
        %1108 = vmatmul.mubr.bf16.gmra.mrb[0].mxu0 %v1070
        %v1109 = vpop.f32.mrb[0].mxu0
        %v1110 = vadd.f32 0.0, %v1109
        %v1111 = vpop.f32.mrb[0].mxu0
        %v1112 = vpop.f32.mrb[0].mxu0
        %v1113 = vpop.f32.mrb[0].mxu0
        %1114 = vdwg.mxu0
        %v1115 = vadd.f32 %v1036, %v1110
        %v1116 = vld [vmem:[%s227] sm:$0xf]
        %v1117 = vrot.slane %v1058, 1
        %v1118 = vsel %vm246, %v1059, %v1117
        %v1119 = vrot.slane %v1060, 7
        %v1120 = vsel %vm249, %v1119, %v1118
        %v1121 = vrot.slane %v1061, 6
        %v1122 = vsel %vm252, %v1121, %v1120
        %v1123 = vpack.c.b16 %v1122, %v1122
        %v1125 = vsel %vm255, %v1116, 0
        %v1128 = vsel %vm259, %v1123, 0
        %1130 = vmatprep.subr.bf16.mxu0 0
        %1131 = vmatpush1.bf16.msra.mxu0 %v1128
        %1132 = vmatprep.subr.bf16.mxu0 0
        %1133 = vmatpush1.bf16.msra.mxu0 0
        %1134 = vmatprep.subr.bf16.mxu0 0
        %1135 = vmatpush1.bf16.msra.mxu0 0
        %1136 = vmatprep.subr.bf16.mxu0 0
        %1137 = vmatpush1.bf16.msra.mxu0 0
        %1138 = vmatprep.subr.bf16.mxu0 0
        %1139 = vmatpush1.bf16.msra.mxu0 0
        %1140 = vmatprep.subr.bf16.mxu0 0
        %1141 = vmatpush1.bf16.msra.mxu0 0
        %1142 = vmatprep.subr.bf16.mxu0 0
        %1143 = vmatpush1.bf16.msra.mxu0 0
        %1144 = vmatprep.subr.bf16.mxu0 0
        %1145 = vmatpush1.bf16.msra.mxu0 0
        %1146 = vmatprep.subr.bf16.mxu0 0
        %1147 = vmatpush1.bf16.msra.mxu0 0
        %1148 = vmatprep.subr.bf16.mxu0 0
        %1149 = vmatpush1.bf16.msra.mxu0 0
        %1150 = vmatprep.subr.bf16.mxu0 0
        %1151 = vmatpush1.bf16.msra.mxu0 0
        %1152 = vmatprep.subr.bf16.mxu0 0
        %1153 = vmatpush1.bf16.msra.mxu0 0
        %1154 = vmatprep.subr.bf16.mxu0 0
        %1155 = vmatpush1.bf16.msra.mxu0 0
        %1156 = vmatprep.subr.bf16.mxu0 0
        %1157 = vmatpush1.bf16.msra.mxu0 0
        %1158 = vmatprep.subr.bf16.mxu0 0
        %1159 = vmatpush1.bf16.msra.mxu0 0
        %1160 = vmatprep.subr.bf16.mxu0 0
        %1161 = vmatpush1.bf16.msra.mxu0 0
        %1162 = vmatprep.mubr.bf16.mxu0 0
        %1163 = vmatmul.mubr.bf16.gmra.mrb[0].mxu0 %v1125
        %v1164 = vpop.f32.mrb[0].mxu0
        %v1165 = vadd.f32 0.0, %v1164
        %v1166 = vpop.f32.mrb[0].mxu0
        %v1167 = vpop.f32.mrb[0].mxu0
        %v1168 = vpop.f32.mrb[0].mxu0
        %1169 = vdwg.mxu0
        %v1170 = vadd.f32 %v1115, %v1165
        %v1171 = vld [vmem:[%s356] sm:$0xf]
        %v1172 = vld [vmem:[%s184 + $0x4] sm:$0x2]
        %v1173 = vld [vmem:[%s184 + $0xc] sm:$0x2]
        %v1174 = vld [vmem:[%s184 + $0x14] sm:$0x2]
        %v1175 = vld [vmem:[%s184 + $0x1c] sm:$0x2]
        %v1180 = vunpack.c.l.b16 %v1172
        %v1181 = vunpack.c.l.b16 %v1173
        %v1182 = vunpack.c.l.b16 %v1174
        %v1183 = vunpack.c.l.b16 %v1175
        %v1184 = vpack.c.b16 %v1180, %v1180
        %v1185 = vpack.c.b16 %v1181, %v1181
        %v1186 = vpack.c.b16 %v1182, %v1182
        %v1187 = vpack.c.b16 %v1183, %v1183
        %v1188 = vunpack.c.l.b16 %v1184
        %v1189 = vunpack.c.l.b16 %v1185
        %v1190 = vunpack.c.l.b16 %v1186
        %v1191 = vunpack.c.l.b16 %v1187
        %v1192 = vrot.slane %v1188, 2
        %v1193 = vrot.slane %v1189, 1
        %v1194 = vsel %vm246, %v1193, %v1192
        %v1195 = vsel %vm249, %v1190, %v1194
        %v1196 = vrot.slane %v1191, 7
        %v1197 = vsel %vm252, %v1196, %v1195
        %v1198 = vpack.c.b16 %v1197, %v1197
        %v1200 = vsel %vm255, %v1171, 0
        %v1203 = vsel %vm259, %v1198, 0
        %1205 = vmatprep.subr.bf16.mxu0 0
        %1206 = vmatpush1.bf16.msra.mxu0 %v1203
        %1207 = vmatprep.subr.bf16.mxu0 0
        %1208 = vmatpush1.bf16.msra.mxu0 0
        %1209 = vmatprep.subr.bf16.mxu0 0
        %1210 = vmatpush1.bf16.msra.mxu0 0
        %1211 = vmatprep.subr.bf16.mxu0 0
        %1212 = vmatpush1.bf16.msra.mxu0 0
        %1213 = vmatprep.subr.bf16.mxu0 0
        %1214 = vmatpush1.bf16.msra.mxu0 0
        %1215 = vmatprep.subr.bf16.mxu0 0
        %1216 = vmatpush1.bf16.msra.mxu0 0
        %1217 = vmatprep.subr.bf16.mxu0 0
        %1218 = vmatpush1.bf16.msra.mxu0 0
        %1219 = vmatprep.subr.bf16.mxu0 0
        %1220 = vmatpush1.bf16.msra.mxu0 0
        %1221 = vmatprep.subr.bf16.mxu0 0
        %1222 = vmatpush1.bf16.msra.mxu0 0
        %1223 = vmatprep.subr.bf16.mxu0 0
        %1224 = vmatpush1.bf16.msra.mxu0 0
        %1225 = vmatprep.subr.bf16.mxu0 0
        %1226 = vmatpush1.bf16.msra.mxu0 0
        %1227 = vmatprep.subr.bf16.mxu0 0
        %1228 = vmatpush1.bf16.msra.mxu0 0
        %1229 = vmatprep.subr.bf16.mxu0 0
        %1230 = vmatpush1.bf16.msra.mxu0 0
        %1231 = vmatprep.subr.bf16.mxu0 0
        %1232 = vmatpush1.bf16.msra.mxu0 0
        %1233 = vmatprep.subr.bf16.mxu0 0
        %1234 = vmatpush1.bf16.msra.mxu0 0
        %1235 = vmatprep.subr.bf16.mxu0 0
        %1236 = vmatpush1.bf16.msra.mxu0 0
        %1237 = vmatprep.mubr.bf16.mxu0 0
        %1238 = vmatmul.mubr.bf16.gmra.mrb[0].mxu0 %v1200
        %v1239 = vpop.f32.mrb[0].mxu0
        %v1240 = vadd.f32 0.0, %v1239
        %v1241 = vpop.f32.mrb[0].mxu0
        %v1242 = vpop.f32.mrb[0].mxu0
        %v1243 = vpop.f32.mrb[0].mxu0
        %1244 = vdwg.mxu0
        %v1245 = vadd.f32 %v1170, %v1240
        %v1246 = vadd.f32 %v1245, %v435
        %v1247 = vmax.f32 %v1246, 0.0
        %v1249 = vcombine.high %v1247, %v1247
        %v1251 = vunpack.c.l.s4 1966171168
        %v1252 = vunpack.c.0.s8 %v1251
        %v1253 = vlaneseq
        %v1254 = vshrl.u32 %v1253, 7
        %v1255 = vsub.s32 %v1252, %v1254
        %v1256 = vrot.slane %v1247, %v1255
        %v1258 = vunpack.c.l.s4 1966171168
        %v1259 = vunpack.c.0.s8 %v1258
        %v1260 = vlaneseq
        %v1261 = vshrl.u32 %v1260, 7
        %v1262 = vsub.s32 %v1259, %v1261
        %v1263 = vrot.slane %v1249, %v1262
        %v1264 = vcombine.high %v1256, %v1256
        %v1265 = vcombine.high %v1263, %v1263
        %v1267 = vunpack.c.l.s4 1966171168
        %v1268 = vunpack.c.0.s8 %v1267
        %v1269 = vlaneseq
        %v1270 = vshrl.u32 %v1269, 7
        %v1271 = vsub.s32 %v1268, %v1270
        %v1272 = vrot.slane %v1256, %v1271
        %v1274 = vunpack.c.l.s4 1966171168
        %v1275 = vunpack.c.0.s8 %v1274
        %v1276 = vlaneseq
        %v1277 = vshrl.u32 %v1276, 7
        %v1278 = vsub.s32 %v1275, %v1277
        %v1279 = vrot.slane %v1263, %v1278
        %v1281 = vunpack.c.l.s4 1966171168
        %v1282 = vunpack.c.0.s8 %v1281
        %v1283 = vlaneseq
        %v1284 = vshrl.u32 %v1283, 7
        %v1285 = vsub.s32 %v1282, %v1284
        %v1286 = vrot.slane %v1264, %v1285
        %v1288 = vunpack.c.l.s4 1966171168
        %v1289 = vunpack.c.0.s8 %v1288
        %v1290 = vlaneseq
        %v1291 = vshrl.u32 %v1290, 7
        %v1292 = vsub.s32 %v1289, %v1291
        %v1293 = vrot.slane %v1265, %v1292
        %v1294 = vcombine.high %v1272, %v1272
        %v1295 = vcombine.high %v1279, %v1279
        %v1296 = vcombine.high %v1286, %v1286
        %v1297 = vcombine.high %v1293, %v1293
        %1306 = vst [vmem:[%s497 + $0x2] sm:$0x1] %v1272
        %1307 = vst [vmem:[%s497 + $0x6] sm:$0x1] %v1286
        %1308 = vst [vmem:[%s497 + $0xa] sm:$0x1] %v1294
        %1309 = vst [vmem:[%s497 + $0xe] sm:$0x1] %v1296
        %1310 = vst [vmem:[%s497 + $0x12] sm:$0x1] %v1279
        %1311 = vst [vmem:[%s497 + $0x16] sm:$0x1] %v1293
        %1312 = vst [vmem:[%s497 + $0x1a] sm:$0x1] %v1295
        %1313 = vst [vmem:[%s497 + $0x1e] sm:$0x1] %v1297
        %v1314 = vld [vmem:[%s1] sm:$0xf]
        %v1315 = vld [vmem:[%s184 + $0x4] sm:$0x2]
        %v1316 = vld [vmem:[%s184 + $0xc] sm:$0x2]
        %v1317 = vld [vmem:[%s184 + $0x14] sm:$0x2]
        %v1318 = vld [vmem:[%s184 + $0x1c] sm:$0x2]
        %v1319 = vld [vmem:[%s511] sm:$0xf]
        %v1324 = vunpack.c.l.b16 %v1315
        %v1325 = vunpack.c.l.b16 %v1316
        %v1326 = vunpack.c.l.b16 %v1317
        %v1327 = vunpack.c.l.b16 %v1318
        %v1328 = vpack.c.b16 %v1324, %v1324
        %v1329 = vpack.c.b16 %v1325, %v1325
        %v1330 = vpack.c.b16 %v1326, %v1326
        %v1331 = vpack.c.b16 %v1327, %v1327
        %v1332 = vunpack.c.l.b16 %v1328
        %v1333 = vunpack.c.l.b16 %v1329
        %v1334 = vunpack.c.l.b16 %v1330
        %v1335 = vunpack.c.l.b16 %v1331
        %v1336 = vrot.slane %v1332, 3
        %v1337 = vrot.slane %v1333, 2
        %v1338 = vsel %vm246, %v1337, %v1336
        %v1339 = vrot.slane %v1334, 1
        %v1340 = vsel %vm249, %v1339, %v1338
        %v1341 = vsel %vm252, %v1335, %v1340
        %v1342 = vpack.c.b16 %v1341, %v1341
        %v1344 = vsel %vm255, %v1319, 0
        %v1347 = vsel %vm259, %v1342, 0
        %1349 = vmatprep.subr.bf16.mxu0 0
        %1350 = vmatpush1.bf16.msra.mxu0 %v1347
        %1351 = vmatprep.subr.bf16.mxu0 0
        %1352 = vmatpush1.bf16.msra.mxu0 0
        %1353 = vmatprep.subr.bf16.mxu0 0
        %1354 = vmatpush1.bf16.msra.mxu0 0
        %1355 = vmatprep.subr.bf16.mxu0 0
        %1356 = vmatpush1.bf16.msra.mxu0 0
        %1357 = vmatprep.subr.bf16.mxu0 0
        %1358 = vmatpush1.bf16.msra.mxu0 0
        %1359 = vmatprep.subr.bf16.mxu0 0
        %1360 = vmatpush1.bf16.msra.mxu0 0
        %1361 = vmatprep.subr.bf16.mxu0 0
        %1362 = vmatpush1.bf16.msra.mxu0 0
        %1363 = vmatprep.subr.bf16.mxu0 0
        %1364 = vmatpush1.bf16.msra.mxu0 0
        %1365 = vmatprep.subr.bf16.mxu0 0
        %1366 = vmatpush1.bf16.msra.mxu0 0
        %1367 = vmatprep.subr.bf16.mxu0 0
        %1368 = vmatpush1.bf16.msra.mxu0 0
        %1369 = vmatprep.subr.bf16.mxu0 0
        %1370 = vmatpush1.bf16.msra.mxu0 0
        %1371 = vmatprep.subr.bf16.mxu0 0
        %1372 = vmatpush1.bf16.msra.mxu0 0
        %1373 = vmatprep.subr.bf16.mxu0 0
        %1374 = vmatpush1.bf16.msra.mxu0 0
        %1375 = vmatprep.subr.bf16.mxu0 0
        %1376 = vmatpush1.bf16.msra.mxu0 0
        %1377 = vmatprep.subr.bf16.mxu0 0
        %1378 = vmatpush1.bf16.msra.mxu0 0
        %1379 = vmatprep.subr.bf16.mxu0 0
        %1380 = vmatpush1.bf16.msra.mxu0 0
        %1381 = vmatprep.mubr.bf16.mxu0 0
        %1382 = vmatmul.mubr.bf16.gmra.mrb[0].mxu0 %v1344
        %v1383 = vpop.f32.mrb[0].mxu0
        %v1384 = vadd.f32 0.0, %v1383
        %v1385 = vpop.f32.mrb[0].mxu0
        %v1386 = vpop.f32.mrb[0].mxu0
        %v1387 = vpop.f32.mrb[0].mxu0
        %1388 = vdwg.mxu0
        %v1389 = vrot.slane %v1332, 2
        %v1390 = vrot.slane %v1333, 1
        %v1391 = vsel %vm246, %v1390, %v1389
        %v1392 = vsel %vm249, %v1334, %v1391
        %v1393 = vrot.slane %v1335, 7
        %v1394 = vsel %vm252, %v1393, %v1392
        %v1395 = vpack.c.b16 %v1394, %v1394
        %v1397 = vsel %vm255, %v1314, 0
        %v1400 = vsel %vm259, %v1395, 0
        %1402 = vmatprep.subr.bf16.mxu0 0
        %1403 = vmatpush1.bf16.msra.mxu0 %v1400
        %1404 = vmatprep.subr.bf16.mxu0 0
        %1405 = vmatpush1.bf16.msra.mxu0 0
        %1406 = vmatprep.subr.bf16.mxu0 0
        %1407 = vmatpush1.bf16.msra.mxu0 0
        %1408 = vmatprep.subr.bf16.mxu0 0
        %1409 = vmatpush1.bf16.msra.mxu0 0
        %1410 = vmatprep.subr.bf16.mxu0 0
        %1411 = vmatpush1.bf16.msra.mxu0 0
        %1412 = vmatprep.subr.bf16.mxu0 0
        %1413 = vmatpush1.bf16.msra.mxu0 0
        %1414 = vmatprep.subr.bf16.mxu0 0
        %1415 = vmatpush1.bf16.msra.mxu0 0
        %1416 = vmatprep.subr.bf16.mxu0 0
        %1417 = vmatpush1.bf16.msra.mxu0 0
        %1418 = vmatprep.subr.bf16.mxu0 0
        %1419 = vmatpush1.bf16.msra.mxu0 0
        %1420 = vmatprep.subr.bf16.mxu0 0
        %1421 = vmatpush1.bf16.msra.mxu0 0
        %1422 = vmatprep.subr.bf16.mxu0 0
        %1423 = vmatpush1.bf16.msra.mxu0 0
        %1424 = vmatprep.subr.bf16.mxu0 0
        %1425 = vmatpush1.bf16.msra.mxu0 0
        %1426 = vmatprep.subr.bf16.mxu0 0
        %1427 = vmatpush1.bf16.msra.mxu0 0
        %1428 = vmatprep.subr.bf16.mxu0 0
        %1429 = vmatpush1.bf16.msra.mxu0 0
        %1430 = vmatprep.subr.bf16.mxu0 0
        %1431 = vmatpush1.bf16.msra.mxu0 0
        %1432 = vmatprep.subr.bf16.mxu0 0
        %1433 = vmatpush1.bf16.msra.mxu0 0
        %1434 = vmatprep.mubr.bf16.mxu0 0
        %1435 = vmatmul.mubr.bf16.gmra.mrb[0].mxu0 %v1397
        %v1436 = vpop.f32.mrb[0].mxu0
        %v1437 = vadd.f32 %v1384, %v1436
        %v1438 = vpop.f32.mrb[0].mxu0
        %v1439 = vpop.f32.mrb[0].mxu0
        %v1440 = vpop.f32.mrb[0].mxu0
        %1441 = vdwg.mxu0
        %v1442 = vld [vmem:[%s221] sm:$0xf]
        %v1443 = vld [vmem:[%s184 + $0x4] sm:$0x4]
        %v1444 = vld [vmem:[%s184 + $0xc] sm:$0x4]
        %v1445 = vld [vmem:[%s184 + $0x14] sm:$0x4]
        %v1446 = vld [vmem:[%s184 + $0x1c] sm:$0x4]
        %v1451 = vunpack.c.l.b16 %v1443
        %v1452 = vunpack.c.l.b16 %v1444
        %v1453 = vunpack.c.l.b16 %v1445
        %v1454 = vunpack.c.l.b16 %v1446
        %v1455 = vpack.c.b16 %v1451, %v1451
        %v1456 = vpack.c.b16 %v1452, %v1452
        %v1457 = vpack.c.b16 %v1453, %v1453
        %v1458 = vpack.c.b16 %v1454, %v1454
        %v1459 = vunpack.c.l.b16 %v1455
        %v1460 = vunpack.c.l.b16 %v1456
        %v1461 = vunpack.c.l.b16 %v1457
        %v1462 = vunpack.c.l.b16 %v1458
        %v1463 = vrot.slane %v1459, 4
        %v1464 = vrot.slane %v1460, 3
        %v1465 = vsel %vm246, %v1464, %v1463
        %v1466 = vrot.slane %v1461, 2
        %v1467 = vsel %vm249, %v1466, %v1465
        %v1468 = vrot.slane %v1462, 1
        %v1469 = vsel %vm252, %v1468, %v1467
        %v1470 = vpack.c.b16 %v1469, %v1469
        %v1472 = vsel %vm255, %v1442, 0
        %v1475 = vsel %vm259, %v1470, 0
        %1477 = vmatprep.subr.bf16.mxu0 0
        %1478 = vmatpush1.bf16.msra.mxu0 %v1475
        %1479 = vmatprep.subr.bf16.mxu0 0
        %1480 = vmatpush1.bf16.msra.mxu0 0
        %1481 = vmatprep.subr.bf16.mxu0 0
        %1482 = vmatpush1.bf16.msra.mxu0 0
        %1483 = vmatprep.subr.bf16.mxu0 0
        %1484 = vmatpush1.bf16.msra.mxu0 0
        %1485 = vmatprep.subr.bf16.mxu0 0
        %1486 = vmatpush1.bf16.msra.mxu0 0
        %1487 = vmatprep.subr.bf16.mxu0 0
        %1488 = vmatpush1.bf16.msra.mxu0 0
        %1489 = vmatprep.subr.bf16.mxu0 0
        %1490 = vmatpush1.bf16.msra.mxu0 0
        %1491 = vmatprep.subr.bf16.mxu0 0
        %1492 = vmatpush1.bf16.msra.mxu0 0
        %1493 = vmatprep.subr.bf16.mxu0 0
        %1494 = vmatpush1.bf16.msra.mxu0 0
        %1495 = vmatprep.subr.bf16.mxu0 0
        %1496 = vmatpush1.bf16.msra.mxu0 0
        %1497 = vmatprep.subr.bf16.mxu0 0
        %1498 = vmatpush1.bf16.msra.mxu0 0
        %1499 = vmatprep.subr.bf16.mxu0 0
        %1500 = vmatpush1.bf16.msra.mxu0 0
        %1501 = vmatprep.subr.bf16.mxu0 0
        %1502 = vmatpush1.bf16.msra.mxu0 0
        %1503 = vmatprep.subr.bf16.mxu0 0
        %1504 = vmatpush1.bf16.msra.mxu0 0
        %1505 = vmatprep.subr.bf16.mxu0 0
        %1506 = vmatpush1.bf16.msra.mxu0 0
        %1507 = vmatprep.subr.bf16.mxu0 0
        %1508 = vmatpush1.bf16.msra.mxu0 0
        %1509 = vmatprep.mubr.bf16.mxu0 0
        %1510 = vmatmul.mubr.bf16.gmra.mrb[0].mxu0 %v1472
        %v1511 = vpop.f32.mrb[0].mxu0
        %v1512 = vadd.f32 0.0, %v1511
        %v1513 = vpop.f32.mrb[0].mxu0
        %v1514 = vpop.f32.mrb[0].mxu0
        %v1515 = vpop.f32.mrb[0].mxu0
        %1516 = vdwg.mxu0
        %v1517 = vadd.f32 %v1437, %v1512
        %v1518 = vld [vmem:[%s227] sm:$0xf]
        %v1519 = vrot.slane %v1459, 5
        %v1520 = vrot.slane %v1460, 4
        %v1521 = vsel %vm246, %v1520, %v1519
        %v1522 = vrot.slane %v1461, 3
        %v1523 = vsel %vm249, %v1522, %v1521
        %v1524 = vrot.slane %v1462, 2
        %v1525 = vsel %vm252, %v1524, %v1523
        %v1526 = vpack.c.b16 %v1525, %v1525
        %v1528 = vsel %vm255, %v1518, 0
        %v1531 = vsel %vm259, %v1526, 0
        %1533 = vmatprep.subr.bf16.mxu0 0
        %1534 = vmatpush1.bf16.msra.mxu0 %v1531
        %1535 = vmatprep.subr.bf16.mxu0 0
        %1536 = vmatpush1.bf16.msra.mxu0 0
        %1537 = vmatprep.subr.bf16.mxu0 0
        %1538 = vmatpush1.bf16.msra.mxu0 0
        %1539 = vmatprep.subr.bf16.mxu0 0
        %1540 = vmatpush1.bf16.msra.mxu0 0
        %1541 = vmatprep.subr.bf16.mxu0 0
        %1542 = vmatpush1.bf16.msra.mxu0 0
        %1543 = vmatprep.subr.bf16.mxu0 0
        %1544 = vmatpush1.bf16.msra.mxu0 0
        %1545 = vmatprep.subr.bf16.mxu0 0
        %1546 = vmatpush1.bf16.msra.mxu0 0
        %1547 = vmatprep.subr.bf16.mxu0 0
        %1548 = vmatpush1.bf16.msra.mxu0 0
        %1549 = vmatprep.subr.bf16.mxu0 0
        %1550 = vmatpush1.bf16.msra.mxu0 0
        %1551 = vmatprep.subr.bf16.mxu0 0
        %1552 = vmatpush1.bf16.msra.mxu0 0
        %1553 = vmatprep.subr.bf16.mxu0 0
        %1554 = vmatpush1.bf16.msra.mxu0 0
        %1555 = vmatprep.subr.bf16.mxu0 0
        %1556 = vmatpush1.bf16.msra.mxu0 0
        %1557 = vmatprep.subr.bf16.mxu0 0
        %1558 = vmatpush1.bf16.msra.mxu0 0
        %1559 = vmatprep.subr.bf16.mxu0 0
        %1560 = vmatpush1.bf16.msra.mxu0 0
        %1561 = vmatprep.subr.bf16.mxu0 0
        %1562 = vmatpush1.bf16.msra.mxu0 0
        %1563 = vmatprep.subr.bf16.mxu0 0
        %1564 = vmatpush1.bf16.msra.mxu0 0
        %1565 = vmatprep.mubr.bf16.mxu0 0
        %1566 = vmatmul.mubr.bf16.gmra.mrb[0].mxu0 %v1528
        %v1567 = vpop.f32.mrb[0].mxu0
        %v1568 = vadd.f32 0.0, %v1567
        %v1569 = vpop.f32.mrb[0].mxu0
        %v1570 = vpop.f32.mrb[0].mxu0
        %v1571 = vpop.f32.mrb[0].mxu0
        %1572 = vdwg.mxu0
        %v1573 = vadd.f32 %v1517, %v1568
        %v1574 = vld [vmem:[%s356] sm:$0xf]
        %v1575 = vld [vmem:[%s184 + $0x4] sm:$0x8]
        %v1576 = vld [vmem:[%s184 + $0xc] sm:$0x8]
        %v1577 = vld [vmem:[%s184 + $0x14] sm:$0x8]
        %v1578 = vld [vmem:[%s184 + $0x1c] sm:$0x8]
        %v1583 = vunpack.c.l.b16 %v1575
        %v1584 = vunpack.c.l.b16 %v1576
        %v1585 = vunpack.c.l.b16 %v1577
        %v1586 = vunpack.c.l.b16 %v1578
        %v1587 = vpack.c.b16 %v1583, %v1583
        %v1588 = vpack.c.b16 %v1584, %v1584
        %v1589 = vpack.c.b16 %v1585, %v1585
        %v1590 = vpack.c.b16 %v1586, %v1586
        %v1591 = vunpack.c.l.b16 %v1587
        %v1592 = vunpack.c.l.b16 %v1588
        %v1593 = vunpack.c.l.b16 %v1589
        %v1594 = vunpack.c.l.b16 %v1590
        %v1595 = vrot.slane %v1591, 6
        %v1596 = vrot.slane %v1592, 5
        %v1597 = vsel %vm246, %v1596, %v1595
        %v1598 = vrot.slane %v1593, 4
        %v1599 = vsel %vm249, %v1598, %v1597
        %v1600 = vrot.slane %v1594, 3
        %v1601 = vsel %vm252, %v1600, %v1599
        %v1602 = vpack.c.b16 %v1601, %v1601
        %v1604 = vsel %vm255, %v1574, 0
        %v1607 = vsel %vm259, %v1602, 0
        %1609 = vmatprep.subr.bf16.mxu0 0
        %1610 = vmatpush1.bf16.msra.mxu0 %v1607
        %1611 = vmatprep.subr.bf16.mxu0 0
        %1612 = vmatpush1.bf16.msra.mxu0 0
        %1613 = vmatprep.subr.bf16.mxu0 0
        %1614 = vmatpush1.bf16.msra.mxu0 0
        %1615 = vmatprep.subr.bf16.mxu0 0
        %1616 = vmatpush1.bf16.msra.mxu0 0
        %1617 = vmatprep.subr.bf16.mxu0 0
        %1618 = vmatpush1.bf16.msra.mxu0 0
        %1619 = vmatprep.subr.bf16.mxu0 0
        %1620 = vmatpush1.bf16.msra.mxu0 0
        %1621 = vmatprep.subr.bf16.mxu0 0
        %1622 = vmatpush1.bf16.msra.mxu0 0
        %1623 = vmatprep.subr.bf16.mxu0 0
        %1624 = vmatpush1.bf16.msra.mxu0 0
        %1625 = vmatprep.subr.bf16.mxu0 0
        %1626 = vmatpush1.bf16.msra.mxu0 0
        %1627 = vmatprep.subr.bf16.mxu0 0
        %1628 = vmatpush1.bf16.msra.mxu0 0
        %1629 = vmatprep.subr.bf16.mxu0 0
        %1630 = vmatpush1.bf16.msra.mxu0 0
        %1631 = vmatprep.subr.bf16.mxu0 0
        %1632 = vmatpush1.bf16.msra.mxu0 0
        %1633 = vmatprep.subr.bf16.mxu0 0
        %1634 = vmatpush1.bf16.msra.mxu0 0
        %1635 = vmatprep.subr.bf16.mxu0 0
        %1636 = vmatpush1.bf16.msra.mxu0 0
        %1637 = vmatprep.subr.bf16.mxu0 0
        %1638 = vmatpush1.bf16.msra.mxu0 0
        %1639 = vmatprep.subr.bf16.mxu0 0
        %1640 = vmatpush1.bf16.msra.mxu0 0
        %1641 = vmatprep.mubr.bf16.mxu0 0
        %1642 = vmatmul.mubr.bf16.gmra.mrb[0].mxu0 %v1604
        %v1643 = vpop.f32.mrb[0].mxu0
        %v1644 = vadd.f32 0.0, %v1643
        %v1645 = vpop.f32.mrb[0].mxu0
        %v1646 = vpop.f32.mrb[0].mxu0
        %v1647 = vpop.f32.mrb[0].mxu0
        %1648 = vdwg.mxu0
        %v1649 = vadd.f32 %v1573, %v1644
        %v1650 = vadd.f32 %v1649, %v435
        %v1651 = vmax.f32 %v1650, 0.0
        %v1653 = vcombine.high %v1651, %v1651
        %v1655 = vunpack.c.l.s4 1966171168
        %v1656 = vunpack.c.0.s8 %v1655
        %v1657 = vlaneseq
        %v1658 = vshrl.u32 %v1657, 7
        %v1659 = vsub.s32 %v1656, %v1658
        %v1660 = vrot.slane %v1651, %v1659
        %v1662 = vunpack.c.l.s4 1966171168
        %v1663 = vunpack.c.0.s8 %v1662
        %v1664 = vlaneseq
        %v1665 = vshrl.u32 %v1664, 7
        %v1666 = vsub.s32 %v1663, %v1665
        %v1667 = vrot.slane %v1653, %v1666
        %v1668 = vcombine.high %v1660, %v1660
        %v1669 = vcombine.high %v1667, %v1667
        %v1671 = vunpack.c.l.s4 1966171168
        %v1672 = vunpack.c.0.s8 %v1671
        %v1673 = vlaneseq
        %v1674 = vshrl.u32 %v1673, 7
        %v1675 = vsub.s32 %v1672, %v1674
        %v1676 = vrot.slane %v1660, %v1675
        %v1678 = vunpack.c.l.s4 1966171168
        %v1679 = vunpack.c.0.s8 %v1678
        %v1680 = vlaneseq
        %v1681 = vshrl.u32 %v1680, 7
        %v1682 = vsub.s32 %v1679, %v1681
        %v1683 = vrot.slane %v1667, %v1682
        %v1685 = vunpack.c.l.s4 1966171168
        %v1686 = vunpack.c.0.s8 %v1685
        %v1687 = vlaneseq
        %v1688 = vshrl.u32 %v1687, 7
        %v1689 = vsub.s32 %v1686, %v1688
        %v1690 = vrot.slane %v1668, %v1689
        %v1692 = vunpack.c.l.s4 1966171168
        %v1693 = vunpack.c.0.s8 %v1692
        %v1694 = vlaneseq
        %v1695 = vshrl.u32 %v1694, 7
        %v1696 = vsub.s32 %v1693, %v1695
        %v1697 = vrot.slane %v1669, %v1696
        %v1698 = vcombine.high %v1676, %v1676
        %v1699 = vcombine.high %v1683, %v1683
        %v1700 = vcombine.high %v1690, %v1690
        %v1701 = vcombine.high %v1697, %v1697
        %1710 = vst [vmem:[%s497 + $0x3] sm:$0x1] %v1676
        %1711 = vst [vmem:[%s497 + $0x7] sm:$0x1] %v1690
        %1712 = vst [vmem:[%s497 + $0xb] sm:$0x1] %v1698
        %1713 = vst [vmem:[%s497 + $0xf] sm:$0x1] %v1700
        %1714 = vst [vmem:[%s497 + $0x13] sm:$0x1] %v1683
        %1715 = vst [vmem:[%s497 + $0x17] sm:$0x1] %v1697
        %1716 = vst [vmem:[%s497 + $0x1b] sm:$0x1] %v1699
        %1717 = vst [vmem:[%s497 + $0x1f] sm:$0x1] %v1701
        %s1718 = smul.u32 4, 16
        %s1719 = smul.u32 %s1718, 1
        %s1720 = smul.u32 %s1719, 1
        %s1721 = sshll.u32 %s1720, 4
        %1722 = dma.done [#allocation2], %s1721
        %s1723 = sand.u32 %s113, 1
        %s1724 = scalar_lea.sflag [#allocation5], %s1723
        %s1725 = sand.u32 %s113, 1
        %s1726 = smul.addr %s1725, 96
        %s1727 = scalar_lea.vmem [#allocation6], %s1726
        // Predicated region
        $region37: #{tpu_custom_call.1} parent=31 // pred_check
          %p1728 = pneg %p123
        $region38: #{tpu_custom_call.1} parent=31 // pred_check_branch
          %1730 = sbr.rel (%p1728) target = $region40
        $region39: #{tpu_custom_call.1} parent=31 // pred_region
          %s1732 = ssub.s32 1536, 1536
          %1733 = vsyncadd %s1724, %s1732
          %s1734 = smul.addr %s25, 48
          %s1735 = sadd.s32 %s26, %s1734
          %s1736 = smul.addr %s1735, 64
          %s1737 = scalar_lea.hbm %s4, %s1736
          %s1738 = sshll.u32 %s1727, 4
          %s1739 = int_to_ptr.vmem [resolvable:$true] %s1738
          %1744 = dma.vmem_to_hbm [thread:$0]  %s1739, 1536, %s1737, %s1724, 64, 128, 4
        $region40: #{tpu_custom_call.1} parent=31 // pred_fallthru
          _
      $region32: #{tpu_custom_call.1} parent=5 // pred_fallthru
        _
      %p1745 = scmp.le.s32.totalorder 2, %s16
      // Predicated region
      $region41: #{tpu_custom_call.1} parent=5 // pred_check
        %p1746 = pneg %p1745
      $region42: #{tpu_custom_call.1} parent=5 // pred_check_branch
        %1748 = sbr.rel (%p1746) target = $region44
      $region43: #{tpu_custom_call.1} parent=5 // pred_region
        %s1749 = ssub.s32 %s16, 2
        // Predicated region
        $region45: #{tpu_custom_call.1} parent=43 // pred_check
          %p1750 = pneg %p129
        $region46: #{tpu_custom_call.1} parent=43 // pred_check_branch
          %1752 = sbr.rel (%p1750) target = $region48
        $region47: #{tpu_custom_call.1} parent=43 // pred_region
          %s1753 = sand.u32 %s114, 1
          %s1754 = scalar_lea.sflag [#allocation5], %s1753
          %s1755 = sand.u32 %s114, 1
          %s1756 = smul.addr %s1755, 96
          %s1757 = scalar_lea.vmem [#allocation6], %s1756
          %1758 = dma.done %s1754, 1536
        $region48: #{tpu_custom_call.1} parent=43 // pred_fallthru
          _
      $region44: #{tpu_custom_call.1} parent=5 // pred_fallthru
        _
    $region6: #{tpu_custom_call.1} parent=1 // loop_footer
      %s20 = sadd.s32 1, %s16
    $region7: #{tpu_custom_call.1} parent=1 // loop_footer_branch
      %15 = sbr.rel target = $region3
    $region8: #{tpu_custom_call.1} parent=1 // loop_exit
      _
    %1759 = vsyncpa [#allocation4], 1
    %s1760 = scalar_lea.sflag [#allocation4], 1
    %1761 = vsyncpa %s1760, 1
    %1762 = vsyncpa [#allocation5], 1
    %s1763 = scalar_lea.sflag [#allocation5], 1
    %1764 = vsyncpa %s1763, 1
  %1765 = vsyncmov [#allocation2]
  %s1766 = vpop.sfrf %1765
  %p1767 = scmp.eq.s32.totalorder %s1766, 0
  %p1768 = pneg %p1767
  %1770 = shalt.err (%p1768)

</llo_original>
